<compile_context>
chip_gen: v5e
topology: v5e:2x2
jax: 0.10.0
libtpu: 0.0.40
codegen_flags: <defaults>
</compile_context>

<pallas_src>
import functools

import numpy as np
import jax
import jax.numpy as jnp
from jax import lax
from jax.experimental import pallas as pl
from jax.experimental.pallas import tpu as pltpu


DEFAULT_MAX_TILE_BYTES = 2 << 20  # ~2 MiB per input tile (safe on v5e/v6e/v7x)


def _round_down_mult(x, m):
    return max(m, (x // m) * m)


# ------------------------------------------------------------------ kernels ---

def _ln_channels_last_kernel(x_ref, w_ref, b_ref, o_ref, *, eps):
    # x_ref: (TILE_ROWS, C); normalize each row over C (the lane axis).
    x = x_ref[...].astype(jnp.float32)
    mean = jnp.mean(x, axis=-1, keepdims=True)            # (T, 1)
    mean_sq = jnp.mean(x * x, axis=-1, keepdims=True)     # (T, 1)  independent reduction
    var = jnp.maximum(mean_sq - mean * mean, 0.0)          # clamp: cancellation safety
    inv = lax.rsqrt(var + eps)                              # EUP slot
    w = w_ref[...].astype(jnp.float32)                      # (1, C) lane-broadcast
    b = b_ref[...].astype(jnp.float32)
    o_ref[...] = ((x - mean) * inv * w + b).astype(o_ref.dtype)


def _ln_channels_first_kernel(x_ref, w_ref, b_ref, o_ref, *, eps):
    # x_ref: (1, C, TILE_HW); normalize over the channel axis (axis=1).
    x = x_ref[...].astype(jnp.float32)
    mean = jnp.mean(x, axis=1, keepdims=True)              # (1, 1, T)
    mean_sq = jnp.mean(x * x, axis=1, keepdims=True)       # (1, 1, T)
    var = jnp.maximum(mean_sq - mean * mean, 0.0)
    inv = lax.rsqrt(var + eps)
    w = w_ref[...].astype(jnp.float32)                      # (1, C, 1) broadcast in mul
    b = b_ref[...].astype(jnp.float32)
    o_ref[...] = ((x - mean) * inv * w + b).astype(o_ref.dtype)


# ----------------------------------------------------------------- wrappers ---

def layer_norm_channels_last(x, weight, bias, eps=1e-6,
                             max_tile_bytes=DEFAULT_MAX_TILE_BYTES):
    """x: (..., C), normalize over the last dim. Matches F.layer_norm."""
    orig_shape = x.shape
    C = orig_shape[-1]
    x2 = x.reshape(-1, C)                                   # metadata-only reshape
    N = x2.shape[0]
    itemsize = jnp.dtype(x2.dtype).itemsize
    bytes_per_row = C * itemsize

    target_rows = max(8, max_tile_bytes // max(bytes_per_row, 1))
    if N <= target_rows or N < 8:
        tile_rows = N                                       # full dim: always legal
    else:
        tile_rows = _round_down_mult(min(target_rows, N), 8)
    grid = (pl.cdiv(N, tile_rows),)
    tile_bytes = tile_rows * bytes_per_row
    vmem_limit = int(min(32 << 20, 6 * tile_bytes + (2 << 20)))

    out = pl.pallas_call(
        functools.partial(_ln_channels_last_kernel, eps=eps),
        out_shape=jax.ShapeDtypeStruct(x2.shape, x.dtype),
        grid=grid,
        in_specs=[
            pl.BlockSpec((tile_rows, C), lambda i: (i, 0)),
            pl.BlockSpec((1, C), lambda i: (0, 0)),          # resident across steps
            pl.BlockSpec((1, C), lambda i: (0, 0)),
        ],
        out_specs=pl.BlockSpec((tile_rows, C), lambda i: (i, 0)),
        compiler_params=pltpu.CompilerParams(
            dimension_semantics=("parallel",),
            vmem_limit_bytes=vmem_limit),
    )(x2, weight.reshape(1, C), bias.reshape(1, C))
    return out.reshape(orig_shape)


def layer_norm_channels_first(x, weight, bias, eps=1e-6,
                              max_tile_bytes=DEFAULT_MAX_TILE_BYTES):
    """x: (B, C, H, W), normalize over the channel dim (ConvNeXt-style)."""
    B, C, H, W = x.shape
    HW = H * W
    x3 = x.reshape(B, C, HW)                                # metadata-only reshape
    itemsize = jnp.dtype(x3.dtype).itemsize
    bytes_per_col = C * itemsize

    target_cols = max(128, max_tile_bytes // max(bytes_per_col, 1))
    if HW <= target_cols or HW < 128:
        tile_hw = HW                                        # full dim: always legal
    else:
        tile_hw = _round_down_mult(min(target_cols, HW), 128)
    grid = (B, pl.cdiv(HW, tile_hw))
    tile_bytes = C * tile_hw * itemsize
    vmem_limit = int(min(32 << 20, 6 * tile_bytes + (2 << 20)))

    out = pl.pallas_call(
        functools.partial(_ln_channels_first_kernel, eps=eps),
        out_shape=jax.ShapeDtypeStruct((B, C, HW), x.dtype),
        grid=grid,
        in_specs=[
            pl.BlockSpec((1, C, tile_hw), lambda b, j: (b, 0, j)),
            pl.BlockSpec((1, C, 1), lambda b, j: (0, 0, 0)),  # resident across steps
            pl.BlockSpec((1, C, 1), lambda b, j: (0, 0, 0)),
        ],
        out_specs=pl.BlockSpec((1, C, tile_hw), lambda b, j: (b, 0, j)),
        compiler_params=pltpu.CompilerParams(
            dimension_semantics=("parallel", "parallel"),
            vmem_limit_bytes=vmem_limit),
    )(x3, weight.reshape(1, C, 1), bias.reshape(1, C, 1))
    return out.reshape(B, C, H, W)


def layer_norm(x, weight, bias, eps=1e-6, data_format="channels_last",
               max_tile_bytes=DEFAULT_MAX_TILE_BYTES):
    """Pallas implementation of the LayerNorm module's forward pass."""
    if data_format == "channels_last":
        return layer_norm_channels_last(x, weight, bias, eps, max_tile_bytes)
    elif data_format == "channels_first":
        return layer_norm_channels_first(x, weight, bias, eps, max_tile_bytes)
    raise NotImplementedError(data_format)


# --------------------------------------------------------------- references ---

def reference_channels_last(x, weight, bias, eps=1e-6):
    u = jnp.mean(x, axis=-1, keepdims=True)
    s = jnp.mean((x - u) ** 2, axis=-1, keepdims=True)
    xn = (x - u) / jnp.sqrt(s + eps)
    return xn * weight + bias


def reference_channels_first(x, weight, bias, eps=1e-6):
    u = jnp.mean(x, axis=1, keepdims=True)
    s = jnp.mean((x - u) ** 2, axis=1, keepdims=True)
    xn = (x - u) / jnp.sqrt(s + eps)
    return weight[None, :, None, None] * xn + bias[None, :, None, None]


# -------------------------------------------------------------------- main ----

if __name__ == "__main__":
    key = jax.random.PRNGKey(0)
    k1, k2, k3, k4, k5, k6, k7, k8 = jax.random.split(key, 8)
    EPS = 1e-6

    # --- channels_last: (B, H, W, C), normalized_shape = C = 128
    B, H, W, C_LAST = 2, 16, 16, 128
    x_cl = jax.random.normal(k1, (B, H, W, C_LAST), jnp.float32)
    w_cl = 1.0 + 0.1 * jax.random.normal(k2, (C_LAST,), jnp.float32)
    b_cl = 0.1 * jax.random.normal(k3, (C_LAST,), jnp.float32)

    y_cl = jax.block_until_ready(
        layer_norm(x_cl, w_cl, b_cl, eps=EPS, data_format="channels_last"))
    r_cl = jax.block_until_ready(reference_channels_last(x_cl, w_cl, b_cl, EPS))
    assert y_cl.shape == x_cl.shape
    np.testing.assert_allclose(np.asarray(y_cl), np.asarray(r_cl),
                               rtol=1e-4, atol=1e-4)

    # Exercise the multi-tile + ragged-edge path (forced small tile budget).
    x_cl2 = jax.random.normal(k7, (2, 15, 16, C_LAST), jnp.float32)  # N=480 rows
    y_cl2 = jax.block_until_ready(
        layer_norm(x_cl2, w_cl, b_cl, eps=EPS, data_format="channels_last",
                   max_tile_bytes=128 * C_LAST * 4))                 # 128-row tiles
    r_cl2 = jax.block_until_ready(reference_channels_last(x_cl2, w_cl, b_cl, EPS))
    np.testing.assert_allclose(np.asarray(y_cl2), np.asarray(r_cl2),
                               rtol=1e-4, atol=1e-4)

    # --- channels_first: (B, C, H, W), normalized_shape = C = 32
    C_FIRST = 32
    x_cf = jax.random.normal(k4, (B, C_FIRST, H, W), jnp.float32)
    w_cf = 1.0 + 0.1 * jax.random.normal(k5, (C_FIRST,), jnp.float32)
    b_cf = 0.1 * jax.random.normal(k6, (C_FIRST,), jnp.float32)

    y_cf = jax.block_until_ready(
        layer_norm(x_cf, w_cf, b_cf, eps=EPS, data_format="channels_first"))
    r_cf = jax.block_until_ready(reference_channels_first(x_cf, w_cf, b_cf, EPS))
    assert y_cf.shape == x_cf.shape
    np.testing.assert_allclose(np.asarray(y_cf), np.asarray(r_cf),
                               rtol=1e-4, atol=1e-4)

    # Exercise the multi-tile + ragged-HW path for channels_first.
    x_cf2 = jax.random.normal(k8, (2, C_FIRST, 20, 20), jnp.float32)  # HW=400
    y_cf2 = jax.block_until_ready(
        layer_norm(x_cf2, w_cf, b_cf, eps=EPS, data_format="channels_first",
                   max_tile_bytes=C_FIRST * 128 * 4))                 # 128-col tiles
    r_cf2 = jax.block_until_ready(reference_channels_first(x_cf2, w_cf, b_cf, EPS))
    np.testing.assert_allclose(np.asarray(y_cf2), np.asarray(r_cf2),
                               rtol=1e-4, atol=1e-4)

    print("KERNEL_OK")
</pallas_src>

<mosaic_0001>
module attributes {stable_mosaic.version = 11 : i64} {
  func.func @_ln_channels_last_kernel(%arg0: i32, %arg1: memref<512x128xf32, #tpu.memory_space<vmem>>, %arg2: memref<1x128xf32, #tpu.memory_space<vmem>>, %arg3: memref<1x128xf32, #tpu.memory_space<vmem>>, %arg4: memref<512x128xf32, #tpu.memory_space<vmem>>) attributes {dimension_semantics = [#tpu.dimension_semantics<parallel>], iteration_bounds = array<i64: 1>, scalar_prefetch = 0 : i64, scratch_operands = 0 : i64, tpu.core_type = #tpu.core_type<tc>, window_params = [{transform_indices = @transform_0, window_bounds = array<i64: 512, 128>}, {pipeline_mode = #tpu.pipeline_mode<synchronous>, transform_indices = @transform_1, window_bounds = array<i64: 1, 128>}, {pipeline_mode = #tpu.pipeline_mode<synchronous>, transform_indices = @transform_2, window_bounds = array<i64: 1, 128>}, {transform_indices = @transform_3, window_bounds = array<i64: 512, 128>}]} {
    %c0 = arith.constant 0 : index
    %c0_0 = arith.constant 0 : index
    %0 = vector.load %arg1[%c0, %c0_0] : memref<512x128xf32, #tpu.memory_space<vmem>>, vector<512x128xf32>
    %cst = arith.constant dense<0.000000e+00> : vector<512xf32>
    %1 = vector.multi_reduction <add>, %0, %cst [1] : vector<512x128xf32> to vector<512xf32>
    %2 = vector.shape_cast %1 : vector<512xf32> to vector<512x1xf32>
    %cst_1 = arith.constant 1.280000e+02 : f32
    %3 = vector.broadcast %cst_1 : f32 to vector<512x1xf32>
    %4 = arith.divf %2, %3 : vector<512x1xf32>
    %5 = arith.mulf %0, %0 : vector<512x128xf32>
    %cst_2 = arith.constant dense<0.000000e+00> : vector<512xf32>
    %6 = vector.multi_reduction <add>, %5, %cst_2 [1] : vector<512x128xf32> to vector<512xf32>
    %7 = vector.shape_cast %6 : vector<512xf32> to vector<512x1xf32>
    %cst_3 = arith.constant 1.280000e+02 : f32
    %8 = vector.broadcast %cst_3 : f32 to vector<512x1xf32>
    %9 = arith.divf %7, %8 : vector<512x1xf32>
    %10 = arith.mulf %4, %4 : vector<512x1xf32>
    %11 = arith.subf %9, %10 : vector<512x1xf32>
    %cst_4 = arith.constant 0.000000e+00 : f32
    %12 = vector.broadcast %cst_4 : f32 to vector<512x1xf32>
    %13 = arith.maximumf %11, %12 : vector<512x1xf32>
    %cst_5 = arith.constant 9.99999997E-7 : f32
    %14 = vector.broadcast %cst_5 : f32 to vector<512x1xf32>
    %15 = arith.addf %13, %14 : vector<512x1xf32>
    %16 = math.rsqrt %15 : vector<512x1xf32>
    %c0_6 = arith.constant 0 : index
    %c0_7 = arith.constant 0 : index
    %17 = vector.load %arg2[%c0_6, %c0_7] : memref<1x128xf32, #tpu.memory_space<vmem>>, vector<1x128xf32>
    %c0_8 = arith.constant 0 : index
    %c0_9 = arith.constant 0 : index
    %18 = vector.load %arg3[%c0_8, %c0_9] : memref<1x128xf32, #tpu.memory_space<vmem>>, vector<1x128xf32>
    %19 = vector.broadcast %4 : vector<512x1xf32> to vector<512x128xf32>
    %20 = arith.subf %0, %19 : vector<512x128xf32>
    %21 = vector.broadcast %16 : vector<512x1xf32> to vector<512x128xf32>
    %22 = arith.mulf %20, %21 : vector<512x128xf32>
    %23 = vector.broadcast %17 : vector<1x128xf32> to vector<512x128xf32>
    %24 = arith.mulf %22, %23 : vector<512x128xf32>
    %25 = vector.broadcast %18 : vector<1x128xf32> to vector<512x128xf32>
    %26 = arith.addf %24, %25 : vector<512x128xf32>
    %c0_10 = arith.constant 0 : index
    %c0_11 = arith.constant 0 : index
    %27 = vector.load %arg4[%c0_10, %c0_11] : memref<512x128xf32, #tpu.memory_space<vmem>>, vector<512x128xf32>
    tpu.vector_store %arg4[%c0_10, %c0_11], %26 {strides = array<i32>} : memref<512x128xf32, #tpu.memory_space<vmem>>, vector<512x128xf32>,
    return
  }
  func.func @transform_0(%arg0: i32) -> (i32, i32) {
    %c0_i32 = arith.constant 0 : i32
    %c0_i32_0 = arith.constant 0 : i32
    return %arg0, %c0_i32 : i32, i32
  }
  func.func @transform_1(%arg0: i32) -> (i32, i32) {
    %c0_i32 = arith.constant 0 : i32
    %c0_i32_0 = arith.constant 0 : i32
    %c0_i32_1 = arith.constant 0 : i32
    return %c0_i32, %c0_i32_0 : i32, i32
  }
  func.func @transform_2(%arg0: i32) -> (i32, i32) {
    %c0_i32 = arith.constant 0 : i32
    %c0_i32_0 = arith.constant 0 : i32
    %c0_i32_1 = arith.constant 0 : i32
    return %c0_i32, %c0_i32_0 : i32, i32
  }
  func.func @transform_3(%arg0: i32) -> (i32, i32) {
    %c0_i32 = arith.constant 0 : i32
    %c0_i32_0 = arith.constant 0 : i32
    return %arg0, %c0_i32 : i32, i32
  }
}

</mosaic_0001>

<llo_original>
// kernel: tpu_custom_call.1
$region0: #{tpu_custom_call.1}
  #allocation0 [shape = 'u32[]', space=smem, size = 0x4, offset = 0x4, fixed_abs, tag = 'smem constant byte address 0x4 - core index']
  #allocation1 [shape = 'u32[72,128]{1,0:T(1,128)}', space=vmem, size = 0x9000, scoped, tag = 'internal scratch']
  %s0 = inlined_call_operand.hbm [shape: f32[512,128], index: 0, kind: input, shape index: {}]
  %s1 = inlined_call_operand.hbm [shape: f32[1,128], index: 1, kind: input, shape index: {}]
  %s2 = inlined_call_operand.vmem [shape: f32[1,128], index: 2, kind: input, shape index: {}]
  %s3 = inlined_call_operand.hbm [shape: f32[512,128], index: 3, kind: output, shape index: {}]
  %s4 = sld [smem:[#allocation0]]
  $region30: #{tpu_custom_call.1} parent=0
    _
  %s6 = ssub.s32 1, %s4
  %s7 = scalar_select 0, %s6, %s4
  $region1: #{tpu_custom_call.1} parent=0
    #allocation2 [shape = 'u8[262144]{0}', space=vmem, size = 0x40000, scoped, tag = 'input window, operand 0, single buffered']
    #allocation3 [shape = 's32[1]{0}', space=sflag, size = 0x4, scoped, tag = 'scoped memory for tpu_custom_call.1']
    #allocation4 [shape = 's32[1]{0}', space=sflag, size = 0x4, scoped, tag = 'scoped memory for tpu_custom_call.1']
    #allocation5 [shape = 'u8[512]{0}', space=vmem, size = 0x400, scoped, tag = 'input window, operand 1, single buffered']
    #allocation6 [shape = 's32[1]{0}', space=sflag, size = 0x4, scoped, tag = 'scoped memory for tpu_custom_call.1']
    #allocation7 [shape = 'u8[262144]{0}', space=vmem, size = 0x40000, scoped, tag = 'output window, operand 0, single buffered']
    %8 = vsyncpa [#allocation3], 0
    %9 = vsyncpa [#allocation6], 0
    %10 = vsyncpa [#allocation4], 0
    // Predicated region
    $region2: #{tpu_custom_call.1} parent=1 // pred_check
      _
    $region3: #{tpu_custom_call.1} parent=1 // pred_check_branch
      %12 = sbr.rel (0) target = $region5
    $region4: #{tpu_custom_call.1} parent=1 // pred_region
      %14 = vsyncadd [#allocation3], 0
      %s15 = sshll.u32 %s0, 4
      %s16 = int_to_ptr.hbm [resolvable:$true] %s15
      %s17 = sshll.u32 [#allocation2], 4
      %s18 = int_to_ptr.vmem [resolvable:$true] %s17
      %23 = dma.hbm_to_vmem [thread:$0]  %s16, 8192, %s18, [#allocation3], 128, 128, 8
    $region5: #{tpu_custom_call.1} parent=1 // pred_fallthru
      _
    // Predicated region
    $region6: #{tpu_custom_call.1} parent=1 // pred_check
      _
    $region7: #{tpu_custom_call.1} parent=1 // pred_check_branch
      %25 = sbr.rel (0) target = $region9
    $region8: #{tpu_custom_call.1} parent=1 // pred_region
      %27 = vsyncadd [#allocation6], 0
      %s29 = sshll.u32 %s1, 4
      %s30 = int_to_ptr.hbm [resolvable:$true] %s29
      %s31 = sshll.u32 [#allocation5], 4
      %s32 = int_to_ptr.vmem [resolvable:$true] %s31
      %34 = dma.hbm_to_vmem [thread:$0]  %s30, 16, %s32, [#allocation6]
    $region9: #{tpu_custom_call.1} parent=1 // pred_fallthru
      _
    // Predicated region
    $region10: #{tpu_custom_call.1} parent=1 // pred_check
      _
    $region11: #{tpu_custom_call.1} parent=1 // pred_check_branch
      %36 = sbr.rel (0) target = $region13
    $region12: #{tpu_custom_call.1} parent=1 // pred_region
      _
    $region13: #{tpu_custom_call.1} parent=1 // pred_fallthru
      _
    // Predicated region
    $region14: #{tpu_custom_call.1} parent=1 // pred_check
      _
    $region15: #{tpu_custom_call.1} parent=1 // pred_check_branch
      %38 = sbr.rel (0) target = $region17
    $region16: #{tpu_custom_call.1} parent=1 // pred_region
      %40 = dma.done [#allocation3], 8192
    $region17: #{tpu_custom_call.1} parent=1 // pred_fallthru
      _
    // Predicated region
    $region18: #{tpu_custom_call.1} parent=1 // pred_check
      _
    $region19: #{tpu_custom_call.1} parent=1 // pred_check_branch
      %42 = sbr.rel (0) target = $region21
    $region20: #{tpu_custom_call.1} parent=1 // pred_region
      %44 = dma.done [#allocation6], 16
    $region21: #{tpu_custom_call.1} parent=1 // pred_fallthru
      _
    %v45 = vld [vmem:[#allocation2] sm:$0xff]
    %v46 = vld [vmem:[#allocation2 + $0x8] sm:$0xff]
    %v47 = vld [vmem:[#allocation2 + $0x10] sm:$0xff]
    %v48 = vld [vmem:[#allocation2 + $0x18] sm:$0xff]
    %v49 = vld [vmem:[#allocation2 + $0x20] sm:$0xff]
    %v50 = vld [vmem:[#allocation2 + $0x28] sm:$0xff]
    %v51 = vld [vmem:[#allocation2 + $0x30] sm:$0xff]
    %v52 = vld [vmem:[#allocation2 + $0x38] sm:$0xff]
    %v53 = vld [vmem:[#allocation2 + $0x40] sm:$0xff]
    %v54 = vld [vmem:[#allocation2 + $0x48] sm:$0xff]
    %v55 = vld [vmem:[#allocation2 + $0x50] sm:$0xff]
    %v56 = vld [vmem:[#allocation2 + $0x58] sm:$0xff]
    %v57 = vld [vmem:[#allocation2 + $0x60] sm:$0xff]
    %v58 = vld [vmem:[#allocation2 + $0x68] sm:$0xff]
    %v59 = vld [vmem:[#allocation2 + $0x70] sm:$0xff]
    %v60 = vld [vmem:[#allocation2 + $0x78] sm:$0xff]
    %v61 = vld [vmem:[#allocation2 + $0x80] sm:$0xff]
    %v62 = vld [vmem:[#allocation2 + $0x88] sm:$0xff]
    %v63 = vld [vmem:[#allocation2 + $0x90] sm:$0xff]
    %v64 = vld [vmem:[#allocation2 + $0x98] sm:$0xff]
    %v65 = vld [vmem:[#allocation2 + $0xa0] sm:$0xff]
    %v66 = vld [vmem:[#allocation2 + $0xa8] sm:$0xff]
    %v67 = vld [vmem:[#allocation2 + $0xb0] sm:$0xff]
    %v68 = vld [vmem:[#allocation2 + $0xb8] sm:$0xff]
    %v69 = vld [vmem:[#allocation2 + $0xc0] sm:$0xff]
    %v70 = vld [vmem:[#allocation2 + $0xc8] sm:$0xff]
    %v71 = vld [vmem:[#allocation2 + $0xd0] sm:$0xff]
    %v72 = vld [vmem:[#allocation2 + $0xd8] sm:$0xff]
    %v73 = vld [vmem:[#allocation2 + $0xe0] sm:$0xff]
    %v74 = vld [vmem:[#allocation2 + $0xe8] sm:$0xff]
    %v75 = vld [vmem:[#allocation2 + $0xf0] sm:$0xff]
    %v76 = vld [vmem:[#allocation2 + $0xf8] sm:$0xff]
    %v77 = vld [vmem:[#allocation2 + $0x100] sm:$0xff]
    %v78 = vld [vmem:[#allocation2 + $0x108] sm:$0xff]
    %v79 = vld [vmem:[#allocation2 + $0x110] sm:$0xff]
    %v80 = vld [vmem:[#allocation2 + $0x118] sm:$0xff]
    %v81 = vld [vmem:[#allocation2 + $0x120] sm:$0xff]
    %v82 = vld [vmem:[#allocation2 + $0x128] sm:$0xff]
    %v83 = vld [vmem:[#allocation2 + $0x130] sm:$0xff]
    %v84 = vld [vmem:[#allocation2 + $0x138] sm:$0xff]
    %v85 = vld [vmem:[#allocation2 + $0x140] sm:$0xff]
    %v86 = vld [vmem:[#allocation2 + $0x148] sm:$0xff]
    %v87 = vld [vmem:[#allocation2 + $0x150] sm:$0xff]
    %v88 = vld [vmem:[#allocation2 + $0x158] sm:$0xff]
    %v89 = vld [vmem:[#allocation2 + $0x160] sm:$0xff]
    %v90 = vld [vmem:[#allocation2 + $0x168] sm:$0xff]
    %v91 = vld [vmem:[#allocation2 + $0x170] sm:$0xff]
    %v92 = vld [vmem:[#allocation2 + $0x178] sm:$0xff]
    %v93 = vld [vmem:[#allocation2 + $0x180] sm:$0xff]
    %v94 = vld [vmem:[#allocation2 + $0x188] sm:$0xff]
    %v95 = vld [vmem:[#allocation2 + $0x190] sm:$0xff]
    %v96 = vld [vmem:[#allocation2 + $0x198] sm:$0xff]
    %v97 = vld [vmem:[#allocation2 + $0x1a0] sm:$0xff]
    %v98 = vld [vmem:[#allocation2 + $0x1a8] sm:$0xff]
    %v99 = vld [vmem:[#allocation2 + $0x1b0] sm:$0xff]
    %v100 = vld [vmem:[#allocation2 + $0x1b8] sm:$0xff]
    %v101 = vld [vmem:[#allocation2 + $0x1c0] sm:$0xff]
    %v102 = vld [vmem:[#allocation2 + $0x1c8] sm:$0xff]
    %v103 = vld [vmem:[#allocation2 + $0x1d0] sm:$0xff]
    %v104 = vld [vmem:[#allocation2 + $0x1d8] sm:$0xff]
    %v105 = vld [vmem:[#allocation2 + $0x1e0] sm:$0xff]
    %v106 = vld [vmem:[#allocation2 + $0x1e8] sm:$0xff]
    %v107 = vld [vmem:[#allocation2 + $0x1f0] sm:$0xff]
    %v108 = vld [vmem:[#allocation2 + $0x1f8] sm:$0xff]
    %109 = vadd.xlane.f32.xlu0 %v45
    %v110 = vpop.xlane.xlu0 %109
    %111 = vadd.xlane.f32.xlu0 %v46
    %v112 = vpop.xlane.xlu0 %111
    %113 = vadd.xlane.f32.xlu0 %v47
    %v114 = vpop.xlane.xlu0 %113
    %115 = vadd.xlane.f32.xlu0 %v48
    %v116 = vpop.xlane.xlu0 %115
    %117 = vadd.xlane.f32.xlu0 %v49
    %v118 = vpop.xlane.xlu0 %117
    %119 = vadd.xlane.f32.xlu0 %v50
    %v120 = vpop.xlane.xlu0 %119
    %121 = vadd.xlane.f32.xlu0 %v51
    %v122 = vpop.xlane.xlu0 %121
    %123 = vadd.xlane.f32.xlu0 %v52
    %v124 = vpop.xlane.xlu0 %123
    %125 = vadd.xlane.f32.xlu0 %v53
    %v126 = vpop.xlane.xlu0 %125
    %127 = vadd.xlane.f32.xlu0 %v54
    %v128 = vpop.xlane.xlu0 %127
    %129 = vadd.xlane.f32.xlu0 %v55
    %v130 = vpop.xlane.xlu0 %129
    %131 = vadd.xlane.f32.xlu0 %v56
    %v132 = vpop.xlane.xlu0 %131
    %133 = vadd.xlane.f32.xlu0 %v57
    %v134 = vpop.xlane.xlu0 %133
    %135 = vadd.xlane.f32.xlu0 %v58
    %v136 = vpop.xlane.xlu0 %135
    %137 = vadd.xlane.f32.xlu0 %v59
    %v138 = vpop.xlane.xlu0 %137
    %139 = vadd.xlane.f32.xlu0 %v60
    %v140 = vpop.xlane.xlu0 %139
    %141 = vadd.xlane.f32.xlu0 %v61
    %v142 = vpop.xlane.xlu0 %141
    %143 = vadd.xlane.f32.xlu0 %v62
    %v144 = vpop.xlane.xlu0 %143
    %145 = vadd.xlane.f32.xlu0 %v63
    %v146 = vpop.xlane.xlu0 %145
    %147 = vadd.xlane.f32.xlu0 %v64
    %v148 = vpop.xlane.xlu0 %147
    %149 = vadd.xlane.f32.xlu0 %v65
    %v150 = vpop.xlane.xlu0 %149
    %151 = vadd.xlane.f32.xlu0 %v66
    %v152 = vpop.xlane.xlu0 %151
    %153 = vadd.xlane.f32.xlu0 %v67
    %v154 = vpop.xlane.xlu0 %153
    %155 = vadd.xlane.f32.xlu0 %v68
    %v156 = vpop.xlane.xlu0 %155
    %157 = vadd.xlane.f32.xlu0 %v69
    %v158 = vpop.xlane.xlu0 %157
    %159 = vadd.xlane.f32.xlu0 %v70
    %v160 = vpop.xlane.xlu0 %159
    %161 = vadd.xlane.f32.xlu0 %v71
    %v162 = vpop.xlane.xlu0 %161
    %163 = vadd.xlane.f32.xlu0 %v72
    %v164 = vpop.xlane.xlu0 %163
    %165 = vadd.xlane.f32.xlu0 %v73
    %v166 = vpop.xlane.xlu0 %165
    %167 = vadd.xlane.f32.xlu0 %v74
    %v168 = vpop.xlane.xlu0 %167
    %169 = vadd.xlane.f32.xlu0 %v75
    %v170 = vpop.xlane.xlu0 %169
    %171 = vadd.xlane.f32.xlu0 %v76
    %v172 = vpop.xlane.xlu0 %171
    %173 = vadd.xlane.f32.xlu0 %v77
    %v174 = vpop.xlane.xlu0 %173
    %175 = vadd.xlane.f32.xlu0 %v78
    %v176 = vpop.xlane.xlu0 %175
    %177 = vadd.xlane.f32.xlu0 %v79
    %v178 = vpop.xlane.xlu0 %177
    %179 = vadd.xlane.f32.xlu0 %v80
    %v180 = vpop.xlane.xlu0 %179
    %181 = vadd.xlane.f32.xlu0 %v81
    %v182 = vpop.xlane.xlu0 %181
    %183 = vadd.xlane.f32.xlu0 %v82
    %v184 = vpop.xlane.xlu0 %183
    %185 = vadd.xlane.f32.xlu0 %v83
    %v186 = vpop.xlane.xlu0 %185
    %187 = vadd.xlane.f32.xlu0 %v84
    %v188 = vpop.xlane.xlu0 %187
    %189 = vadd.xlane.f32.xlu0 %v85
    %v190 = vpop.xlane.xlu0 %189
    %191 = vadd.xlane.f32.xlu0 %v86
    %v192 = vpop.xlane.xlu0 %191
    %193 = vadd.xlane.f32.xlu0 %v87
    %v194 = vpop.xlane.xlu0 %193
    %195 = vadd.xlane.f32.xlu0 %v88
    %v196 = vpop.xlane.xlu0 %195
    %197 = vadd.xlane.f32.xlu0 %v89
    %v198 = vpop.xlane.xlu0 %197
    %199 = vadd.xlane.f32.xlu0 %v90
    %v200 = vpop.xlane.xlu0 %199
    %201 = vadd.xlane.f32.xlu0 %v91
    %v202 = vpop.xlane.xlu0 %201
    %203 = vadd.xlane.f32.xlu0 %v92
    %v204 = vpop.xlane.xlu0 %203
    %205 = vadd.xlane.f32.xlu0 %v93
    %v206 = vpop.xlane.xlu0 %205
    %207 = vadd.xlane.f32.xlu0 %v94
    %v208 = vpop.xlane.xlu0 %207
    %209 = vadd.xlane.f32.xlu0 %v95
    %v210 = vpop.xlane.xlu0 %209
    %211 = vadd.xlane.f32.xlu0 %v96
    %v212 = vpop.xlane.xlu0 %211
    %213 = vadd.xlane.f32.xlu0 %v97
    %v214 = vpop.xlane.xlu0 %213
    %215 = vadd.xlane.f32.xlu0 %v98
    %v216 = vpop.xlane.xlu0 %215
    %217 = vadd.xlane.f32.xlu0 %v99
    %v218 = vpop.xlane.xlu0 %217
    %219 = vadd.xlane.f32.xlu0 %v100
    %v220 = vpop.xlane.xlu0 %219
    %221 = vadd.xlane.f32.xlu0 %v101
    %v222 = vpop.xlane.xlu0 %221
    %223 = vadd.xlane.f32.xlu0 %v102
    %v224 = vpop.xlane.xlu0 %223
    %225 = vadd.xlane.f32.xlu0 %v103
    %v226 = vpop.xlane.xlu0 %225
    %227 = vadd.xlane.f32.xlu0 %v104
    %v228 = vpop.xlane.xlu0 %227
    %229 = vadd.xlane.f32.xlu0 %v105
    %v230 = vpop.xlane.xlu0 %229
    %231 = vadd.xlane.f32.xlu0 %v106
    %v232 = vpop.xlane.xlu0 %231
    %233 = vadd.xlane.f32.xlu0 %v107
    %v234 = vpop.xlane.xlu0 %233
    %235 = vadd.xlane.f32.xlu0 %v108
    %v236 = vpop.xlane.xlu0 %235
    %v237 = vrcp.pop 128.0
    %v238 = vmul.f32 128.0, %v237
    %v239 = vsub.f32 1.0, %v238
    %v240 = vmul.f32 %v237, %v239
    %v241 = vadd.f32 %v237, %v240
    %vm242 = vweird.f32 %v237
    %v243 = vsel %vm242, %v237, %v241
    %v244 = vmul.f32 %v110, %v243
    %v245 = vmul.f32 %v112, %v243
    %v246 = vmul.f32 %v114, %v243
    %v247 = vmul.f32 %v116, %v243
    %v248 = vmul.f32 %v118, %v243
    %v249 = vmul.f32 %v120, %v243
    %v250 = vmul.f32 %v122, %v243
    %v251 = vmul.f32 %v124, %v243
    %v252 = vmul.f32 %v126, %v243
    %v253 = vmul.f32 %v128, %v243
    %v254 = vmul.f32 %v130, %v243
    %v255 = vmul.f32 %v132, %v243
    %v256 = vmul.f32 %v134, %v243
    %v257 = vmul.f32 %v136, %v243
    %v258 = vmul.f32 %v138, %v243
    %v259 = vmul.f32 %v140, %v243
    %v260 = vmul.f32 %v142, %v243
    %v261 = vmul.f32 %v144, %v243
    %v262 = vmul.f32 %v146, %v243
    %v263 = vmul.f32 %v148, %v243
    %v264 = vmul.f32 %v150, %v243
    %v265 = vmul.f32 %v152, %v243
    %v266 = vmul.f32 %v154, %v243
    %v267 = vmul.f32 %v156, %v243
    %v268 = vmul.f32 %v158, %v243
    %v269 = vmul.f32 %v160, %v243
    %v270 = vmul.f32 %v162, %v243
    %v271 = vmul.f32 %v164, %v243
    %v272 = vmul.f32 %v166, %v243
    %v273 = vmul.f32 %v168, %v243
    %v274 = vmul.f32 %v170, %v243
    %v275 = vmul.f32 %v172, %v243
    %v276 = vmul.f32 %v174, %v243
    %v277 = vmul.f32 %v176, %v243
    %v278 = vmul.f32 %v178, %v243
    %v279 = vmul.f32 %v180, %v243
    %v280 = vmul.f32 %v182, %v243
    %v281 = vmul.f32 %v184, %v243
    %v282 = vmul.f32 %v186, %v243
    %v283 = vmul.f32 %v188, %v243
    %v284 = vmul.f32 %v190, %v243
    %v285 = vmul.f32 %v192, %v243
    %v286 = vmul.f32 %v194, %v243
    %v287 = vmul.f32 %v196, %v243
    %v288 = vmul.f32 %v198, %v243
    %v289 = vmul.f32 %v200, %v243
    %v290 = vmul.f32 %v202, %v243
    %v291 = vmul.f32 %v204, %v243
    %v292 = vmul.f32 %v206, %v243
    %v293 = vmul.f32 %v208, %v243
    %v294 = vmul.f32 %v210, %v243
    %v295 = vmul.f32 %v212, %v243
    %v296 = vmul.f32 %v214, %v243
    %v297 = vmul.f32 %v216, %v243
    %v298 = vmul.f32 %v218, %v243
    %v299 = vmul.f32 %v220, %v243
    %v300 = vmul.f32 %v222, %v243
    %v301 = vmul.f32 %v224, %v243
    %v302 = vmul.f32 %v226, %v243
    %v303 = vmul.f32 %v228, %v243
    %v304 = vmul.f32 %v230, %v243
    %v305 = vmul.f32 %v232, %v243
    %v306 = vmul.f32 %v234, %v243
    %v307 = vmul.f32 %v236, %v243
    %v308 = vmul.f32 %v45, %v45
    %v309 = vmul.f32 %v46, %v46
    %v310 = vmul.f32 %v47, %v47
    %v311 = vmul.f32 %v48, %v48
    %v312 = vmul.f32 %v49, %v49
    %v313 = vmul.f32 %v50, %v50
    %v314 = vmul.f32 %v51, %v51
    %v315 = vmul.f32 %v52, %v52
    %v316 = vmul.f32 %v53, %v53
    %v317 = vmul.f32 %v54, %v54
    %v318 = vmul.f32 %v55, %v55
    %v319 = vmul.f32 %v56, %v56
    %v320 = vmul.f32 %v57, %v57
    %v321 = vmul.f32 %v58, %v58
    %v322 = vmul.f32 %v59, %v59
    %v323 = vmul.f32 %v60, %v60
    %v324 = vmul.f32 %v61, %v61
    %v325 = vmul.f32 %v62, %v62
    %v326 = vmul.f32 %v63, %v63
    %v327 = vmul.f32 %v64, %v64
    %v328 = vmul.f32 %v65, %v65
    %v329 = vmul.f32 %v66, %v66
    %v330 = vmul.f32 %v67, %v67
    %v331 = vmul.f32 %v68, %v68
    %v332 = vmul.f32 %v69, %v69
    %v333 = vmul.f32 %v70, %v70
    %v334 = vmul.f32 %v71, %v71
    %v335 = vmul.f32 %v72, %v72
    %v336 = vmul.f32 %v73, %v73
    %v337 = vmul.f32 %v74, %v74
    %v338 = vmul.f32 %v75, %v75
    %v339 = vmul.f32 %v76, %v76
    %v340 = vmul.f32 %v77, %v77
    %v341 = vmul.f32 %v78, %v78
    %v342 = vmul.f32 %v79, %v79
    %v343 = vmul.f32 %v80, %v80
    %v344 = vmul.f32 %v81, %v81
    %v345 = vmul.f32 %v82, %v82
    %v346 = vmul.f32 %v83, %v83
    %v347 = vmul.f32 %v84, %v84
    %v348 = vmul.f32 %v85, %v85
    %v349 = vmul.f32 %v86, %v86
    %v350 = vmul.f32 %v87, %v87
    %v351 = vmul.f32 %v88, %v88
    %v352 = vmul.f32 %v89, %v89
    %v353 = vmul.f32 %v90, %v90
    %v354 = vmul.f32 %v91, %v91
    %v355 = vmul.f32 %v92, %v92
    %v356 = vmul.f32 %v93, %v93
    %v357 = vmul.f32 %v94, %v94
    %v358 = vmul.f32 %v95, %v95
    %v359 = vmul.f32 %v96, %v96
    %v360 = vmul.f32 %v97, %v97
    %v361 = vmul.f32 %v98, %v98
    %v362 = vmul.f32 %v99, %v99
    %v363 = vmul.f32 %v100, %v100
    %v364 = vmul.f32 %v101, %v101
    %v365 = vmul.f32 %v102, %v102
    %v366 = vmul.f32 %v103, %v103
    %v367 = vmul.f32 %v104, %v104
    %v368 = vmul.f32 %v105, %v105
    %v369 = vmul.f32 %v106, %v106
    %v370 = vmul.f32 %v107, %v107
    %v371 = vmul.f32 %v108, %v108
    %372 = vadd.xlane.f32.xlu0 %v308
    %v373 = vpop.xlane.xlu0 %372
    %374 = vadd.xlane.f32.xlu0 %v309
    %v375 = vpop.xlane.xlu0 %374
    %376 = vadd.xlane.f32.xlu0 %v310
    %v377 = vpop.xlane.xlu0 %376
    %378 = vadd.xlane.f32.xlu0 %v311
    %v379 = vpop.xlane.xlu0 %378
    %380 = vadd.xlane.f32.xlu0 %v312
    %v381 = vpop.xlane.xlu0 %380
    %382 = vadd.xlane.f32.xlu0 %v313
    %v383 = vpop.xlane.xlu0 %382
    %384 = vadd.xlane.f32.xlu0 %v314
    %v385 = vpop.xlane.xlu0 %384
    %386 = vadd.xlane.f32.xlu0 %v315
    %v387 = vpop.xlane.xlu0 %386
    %388 = vadd.xlane.f32.xlu0 %v316
    %v389 = vpop.xlane.xlu0 %388
    %390 = vadd.xlane.f32.xlu0 %v317
    %v391 = vpop.xlane.xlu0 %390
    %392 = vadd.xlane.f32.xlu0 %v318
    %v393 = vpop.xlane.xlu0 %392
    %394 = vadd.xlane.f32.xlu0 %v319
    %v395 = vpop.xlane.xlu0 %394
    %396 = vadd.xlane.f32.xlu0 %v320
    %v397 = vpop.xlane.xlu0 %396
    %398 = vadd.xlane.f32.xlu0 %v321
    %v399 = vpop.xlane.xlu0 %398
    %400 = vadd.xlane.f32.xlu0 %v322
    %v401 = vpop.xlane.xlu0 %400
    %402 = vadd.xlane.f32.xlu0 %v323
    %v403 = vpop.xlane.xlu0 %402
    %404 = vadd.xlane.f32.xlu0 %v324
    %v405 = vpop.xlane.xlu0 %404
    %406 = vadd.xlane.f32.xlu0 %v325
    %v407 = vpop.xlane.xlu0 %406
    %408 = vadd.xlane.f32.xlu0 %v326
    %v409 = vpop.xlane.xlu0 %408
    %410 = vadd.xlane.f32.xlu0 %v327
    %v411 = vpop.xlane.xlu0 %410
    %412 = vadd.xlane.f32.xlu0 %v328
    %v413 = vpop.xlane.xlu0 %412
    %414 = vadd.xlane.f32.xlu0 %v329
    %v415 = vpop.xlane.xlu0 %414
    %416 = vadd.xlane.f32.xlu0 %v330
    %v417 = vpop.xlane.xlu0 %416
    %418 = vadd.xlane.f32.xlu0 %v331
    %v419 = vpop.xlane.xlu0 %418
    %420 = vadd.xlane.f32.xlu0 %v332
    %v421 = vpop.xlane.xlu0 %420
    %422 = vadd.xlane.f32.xlu0 %v333
    %v423 = vpop.xlane.xlu0 %422
    %424 = vadd.xlane.f32.xlu0 %v334
    %v425 = vpop.xlane.xlu0 %424
    %426 = vadd.xlane.f32.xlu0 %v335
    %v427 = vpop.xlane.xlu0 %426
    %428 = vadd.xlane.f32.xlu0 %v336
    %v429 = vpop.xlane.xlu0 %428
    %430 = vadd.xlane.f32.xlu0 %v337
    %v431 = vpop.xlane.xlu0 %430
    %432 = vadd.xlane.f32.xlu0 %v338
    %v433 = vpop.xlane.xlu0 %432
    %434 = vadd.xlane.f32.xlu0 %v339
    %v435 = vpop.xlane.xlu0 %434
    %436 = vadd.xlane.f32.xlu0 %v340
    %v437 = vpop.xlane.xlu0 %436
    %438 = vadd.xlane.f32.xlu0 %v341
    %v439 = vpop.xlane.xlu0 %438
    %440 = vadd.xlane.f32.xlu0 %v342
    %v441 = vpop.xlane.xlu0 %440
    %442 = vadd.xlane.f32.xlu0 %v343
    %v443 = vpop.xlane.xlu0 %442
    %444 = vadd.xlane.f32.xlu0 %v344
    %v445 = vpop.xlane.xlu0 %444
    %446 = vadd.xlane.f32.xlu0 %v345
    %v447 = vpop.xlane.xlu0 %446
    %448 = vadd.xlane.f32.xlu0 %v346
    %v449 = vpop.xlane.xlu0 %448
    %450 = vadd.xlane.f32.xlu0 %v347
    %v451 = vpop.xlane.xlu0 %450
    %452 = vadd.xlane.f32.xlu0 %v348
    %v453 = vpop.xlane.xlu0 %452
    %454 = vadd.xlane.f32.xlu0 %v349
    %v455 = vpop.xlane.xlu0 %454
    %456 = vadd.xlane.f32.xlu0 %v350
    %v457 = vpop.xlane.xlu0 %456
    %458 = vadd.xlane.f32.xlu0 %v351
    %v459 = vpop.xlane.xlu0 %458
    %460 = vadd.xlane.f32.xlu0 %v352
    %v461 = vpop.xlane.xlu0 %460
    %462 = vadd.xlane.f32.xlu0 %v353
    %v463 = vpop.xlane.xlu0 %462
    %464 = vadd.xlane.f32.xlu0 %v354
    %v465 = vpop.xlane.xlu0 %464
    %466 = vadd.xlane.f32.xlu0 %v355
    %v467 = vpop.xlane.xlu0 %466
    %468 = vadd.xlane.f32.xlu0 %v356
    %v469 = vpop.xlane.xlu0 %468
    %470 = vadd.xlane.f32.xlu0 %v357
    %v471 = vpop.xlane.xlu0 %470
    %472 = vadd.xlane.f32.xlu0 %v358
    %v473 = vpop.xlane.xlu0 %472
    %474 = vadd.xlane.f32.xlu0 %v359
    %v475 = vpop.xlane.xlu0 %474
    %476 = vadd.xlane.f32.xlu0 %v360
    %v477 = vpop.xlane.xlu0 %476
    %478 = vadd.xlane.f32.xlu0 %v361
    %v479 = vpop.xlane.xlu0 %478
    %480 = vadd.xlane.f32.xlu0 %v362
    %v481 = vpop.xlane.xlu0 %480
    %482 = vadd.xlane.f32.xlu0 %v363
    %v483 = vpop.xlane.xlu0 %482
    %484 = vadd.xlane.f32.xlu0 %v364
    %v485 = vpop.xlane.xlu0 %484
    %486 = vadd.xlane.f32.xlu0 %v365
    %v487 = vpop.xlane.xlu0 %486
    %488 = vadd.xlane.f32.xlu0 %v366
    %v489 = vpop.xlane.xlu0 %488
    %490 = vadd.xlane.f32.xlu0 %v367
    %v491 = vpop.xlane.xlu0 %490
    %492 = vadd.xlane.f32.xlu0 %v368
    %v493 = vpop.xlane.xlu0 %492
    %494 = vadd.xlane.f32.xlu0 %v369
    %v495 = vpop.xlane.xlu0 %494
    %496 = vadd.xlane.f32.xlu0 %v370
    %v497 = vpop.xlane.xlu0 %496
    %498 = vadd.xlane.f32.xlu0 %v371
    %v499 = vpop.xlane.xlu0 %498
    %v500 = vmul.f32 %v373, %v243
    %v501 = vmul.f32 %v375, %v243
    %v502 = vmul.f32 %v377, %v243
    %v503 = vmul.f32 %v379, %v243
    %v504 = vmul.f32 %v381, %v243
    %v505 = vmul.f32 %v383, %v243
    %v506 = vmul.f32 %v385, %v243
    %v507 = vmul.f32 %v387, %v243
    %v508 = vmul.f32 %v389, %v243
    %v509 = vmul.f32 %v391, %v243
    %v510 = vmul.f32 %v393, %v243
    %v511 = vmul.f32 %v395, %v243
    %v512 = vmul.f32 %v397, %v243
    %v513 = vmul.f32 %v399, %v243
    %v514 = vmul.f32 %v401, %v243
    %v515 = vmul.f32 %v403, %v243
    %v516 = vmul.f32 %v405, %v243
    %v517 = vmul.f32 %v407, %v243
    %v518 = vmul.f32 %v409, %v243
    %v519 = vmul.f32 %v411, %v243
    %v520 = vmul.f32 %v413, %v243
    %v521 = vmul.f32 %v415, %v243
    %v522 = vmul.f32 %v417, %v243
    %v523 = vmul.f32 %v419, %v243
    %v524 = vmul.f32 %v421, %v243
    %v525 = vmul.f32 %v423, %v243
    %v526 = vmul.f32 %v425, %v243
    %v527 = vmul.f32 %v427, %v243
    %v528 = vmul.f32 %v429, %v243
    %v529 = vmul.f32 %v431, %v243
    %v530 = vmul.f32 %v433, %v243
    %v531 = vmul.f32 %v435, %v243
    %v532 = vmul.f32 %v437, %v243
    %v533 = vmul.f32 %v439, %v243
    %v534 = vmul.f32 %v441, %v243
    %v535 = vmul.f32 %v443, %v243
    %v536 = vmul.f32 %v445, %v243
    %v537 = vmul.f32 %v447, %v243
    %v538 = vmul.f32 %v449, %v243
    %v539 = vmul.f32 %v451, %v243
    %v540 = vmul.f32 %v453, %v243
    %v541 = vmul.f32 %v455, %v243
    %v542 = vmul.f32 %v457, %v243
    %v543 = vmul.f32 %v459, %v243
    %v544 = vmul.f32 %v461, %v243
    %v545 = vmul.f32 %v463, %v243
    %v546 = vmul.f32 %v465, %v243
    %v547 = vmul.f32 %v467, %v243
    %v548 = vmul.f32 %v469, %v243
    %v549 = vmul.f32 %v471, %v243
    %v550 = vmul.f32 %v473, %v243
    %v551 = vmul.f32 %v475, %v243
    %v552 = vmul.f32 %v477, %v243
    %v553 = vmul.f32 %v479, %v243
    %v554 = vmul.f32 %v481, %v243
    %v555 = vmul.f32 %v483, %v243
    %v556 = vmul.f32 %v485, %v243
    %v557 = vmul.f32 %v487, %v243
    %v558 = vmul.f32 %v489, %v243
    %v559 = vmul.f32 %v491, %v243
    %v560 = vmul.f32 %v493, %v243
    %v561 = vmul.f32 %v495, %v243
    %v562 = vmul.f32 %v497, %v243
    %v563 = vmul.f32 %v499, %v243
    %v564 = vmul.f32 %v244, %v244
    %v565 = vmul.f32 %v245, %v245
    %v566 = vmul.f32 %v246, %v246
    %v567 = vmul.f32 %v247, %v247
    %v568 = vmul.f32 %v248, %v248
    %v569 = vmul.f32 %v249, %v249
    %v570 = vmul.f32 %v250, %v250
    %v571 = vmul.f32 %v251, %v251
    %v572 = vmul.f32 %v252, %v252
    %v573 = vmul.f32 %v253, %v253
    %v574 = vmul.f32 %v254, %v254
    %v575 = vmul.f32 %v255, %v255
    %v576 = vmul.f32 %v256, %v256
    %v577 = vmul.f32 %v257, %v257
    %v578 = vmul.f32 %v258, %v258
    %v579 = vmul.f32 %v259, %v259
    %v580 = vmul.f32 %v260, %v260
    %v581 = vmul.f32 %v261, %v261
    %v582 = vmul.f32 %v262, %v262
    %v583 = vmul.f32 %v263, %v263
    %v584 = vmul.f32 %v264, %v264
    %v585 = vmul.f32 %v265, %v265
    %v586 = vmul.f32 %v266, %v266
    %v587 = vmul.f32 %v267, %v267
    %v588 = vmul.f32 %v268, %v268
    %v589 = vmul.f32 %v269, %v269
    %v590 = vmul.f32 %v270, %v270
    %v591 = vmul.f32 %v271, %v271
    %v592 = vmul.f32 %v272, %v272
    %v593 = vmul.f32 %v273, %v273
    %v594 = vmul.f32 %v274, %v274
    %v595 = vmul.f32 %v275, %v275
    %v596 = vmul.f32 %v276, %v276
    %v597 = vmul.f32 %v277, %v277
    %v598 = vmul.f32 %v278, %v278
    %v599 = vmul.f32 %v279, %v279
    %v600 = vmul.f32 %v280, %v280
    %v601 = vmul.f32 %v281, %v281
    %v602 = vmul.f32 %v282, %v282
    %v603 = vmul.f32 %v283, %v283
    %v604 = vmul.f32 %v284, %v284
    %v605 = vmul.f32 %v285, %v285
    %v606 = vmul.f32 %v286, %v286
    %v607 = vmul.f32 %v287, %v287
    %v608 = vmul.f32 %v288, %v288
    %v609 = vmul.f32 %v289, %v289
    %v610 = vmul.f32 %v290, %v290
    %v611 = vmul.f32 %v291, %v291
    %v612 = vmul.f32 %v292, %v292
    %v613 = vmul.f32 %v293, %v293
    %v614 = vmul.f32 %v294, %v294
    %v615 = vmul.f32 %v295, %v295
    %v616 = vmul.f32 %v296, %v296
    %v617 = vmul.f32 %v297, %v297
    %v618 = vmul.f32 %v298, %v298
    %v619 = vmul.f32 %v299, %v299
    %v620 = vmul.f32 %v300, %v300
    %v621 = vmul.f32 %v301, %v301
    %v622 = vmul.f32 %v302, %v302
    %v623 = vmul.f32 %v303, %v303
    %v624 = vmul.f32 %v304, %v304
    %v625 = vmul.f32 %v305, %v305
    %v626 = vmul.f32 %v306, %v306
    %v627 = vmul.f32 %v307, %v307
    %v628 = vsub.f32 %v500, %v564
    %v629 = vsub.f32 %v501, %v565
    %v630 = vsub.f32 %v502, %v566
    %v631 = vsub.f32 %v503, %v567
    %v632 = vsub.f32 %v504, %v568
    %v633 = vsub.f32 %v505, %v569
    %v634 = vsub.f32 %v506, %v570
    %v635 = vsub.f32 %v507, %v571
    %v636 = vsub.f32 %v508, %v572
    %v637 = vsub.f32 %v509, %v573
    %v638 = vsub.f32 %v510, %v574
    %v639 = vsub.f32 %v511, %v575
    %v640 = vsub.f32 %v512, %v576
    %v641 = vsub.f32 %v513, %v577
    %v642 = vsub.f32 %v514, %v578
    %v643 = vsub.f32 %v515, %v579
    %v644 = vsub.f32 %v516, %v580
    %v645 = vsub.f32 %v517, %v581
    %v646 = vsub.f32 %v518, %v582
    %v647 = vsub.f32 %v519, %v583
    %v648 = vsub.f32 %v520, %v584
    %v649 = vsub.f32 %v521, %v585
    %v650 = vsub.f32 %v522, %v586
    %v651 = vsub.f32 %v523, %v587
    %v652 = vsub.f32 %v524, %v588
    %v653 = vsub.f32 %v525, %v589
    %v654 = vsub.f32 %v526, %v590
    %v655 = vsub.f32 %v527, %v591
    %v656 = vsub.f32 %v528, %v592
    %v657 = vsub.f32 %v529, %v593
    %v658 = vsub.f32 %v530, %v594
    %v659 = vsub.f32 %v531, %v595
    %v660 = vsub.f32 %v532, %v596
    %v661 = vsub.f32 %v533, %v597
    %v662 = vsub.f32 %v534, %v598
    %v663 = vsub.f32 %v535, %v599
    %v664 = vsub.f32 %v536, %v600
    %v665 = vsub.f32 %v537, %v601
    %v666 = vsub.f32 %v538, %v602
    %v667 = vsub.f32 %v539, %v603
    %v668 = vsub.f32 %v540, %v604
    %v669 = vsub.f32 %v541, %v605
    %v670 = vsub.f32 %v542, %v606
    %v671 = vsub.f32 %v543, %v607
    %v672 = vsub.f32 %v544, %v608
    %v673 = vsub.f32 %v545, %v609
    %v674 = vsub.f32 %v546, %v610
    %v675 = vsub.f32 %v547, %v611
    %v676 = vsub.f32 %v548, %v612
    %v677 = vsub.f32 %v549, %v613
    %v678 = vsub.f32 %v550, %v614
    %v679 = vsub.f32 %v551, %v615
    %v680 = vsub.f32 %v552, %v616
    %v681 = vsub.f32 %v553, %v617
    %v682 = vsub.f32 %v554, %v618
    %v683 = vsub.f32 %v555, %v619
    %v684 = vsub.f32 %v556, %v620
    %v685 = vsub.f32 %v557, %v621
    %v686 = vsub.f32 %v558, %v622
    %v687 = vsub.f32 %v559, %v623
    %v688 = vsub.f32 %v560, %v624
    %v689 = vsub.f32 %v561, %v625
    %v690 = vsub.f32 %v562, %v626
    %v691 = vsub.f32 %v563, %v627
    %v692 = vmax.f32 %v628, 0.0
    %v693 = vmax.f32 %v629, 0.0
    %v694 = vmax.f32 %v630, 0.0
    %v695 = vmax.f32 %v631, 0.0
    %v696 = vmax.f32 %v632, 0.0
    %v697 = vmax.f32 %v633, 0.0
    %v698 = vmax.f32 %v634, 0.0
    %v699 = vmax.f32 %v635, 0.0
    %v700 = vmax.f32 %v636, 0.0
    %v701 = vmax.f32 %v637, 0.0
    %v702 = vmax.f32 %v638, 0.0
    %v703 = vmax.f32 %v639, 0.0
    %v704 = vmax.f32 %v640, 0.0
    %v705 = vmax.f32 %v641, 0.0
    %v706 = vmax.f32 %v642, 0.0
    %v707 = vmax.f32 %v643, 0.0
    %v708 = vmax.f32 %v644, 0.0
    %v709 = vmax.f32 %v645, 0.0
    %v710 = vmax.f32 %v646, 0.0
    %v711 = vmax.f32 %v647, 0.0
    %v712 = vmax.f32 %v648, 0.0
    %v713 = vmax.f32 %v649, 0.0
    %v714 = vmax.f32 %v650, 0.0
    %v715 = vmax.f32 %v651, 0.0
    %v716 = vmax.f32 %v652, 0.0
    %v717 = vmax.f32 %v653, 0.0
    %v718 = vmax.f32 %v654, 0.0
    %v719 = vmax.f32 %v655, 0.0
    %v720 = vmax.f32 %v656, 0.0
    %v721 = vmax.f32 %v657, 0.0
    %v722 = vmax.f32 %v658, 0.0
    %v723 = vmax.f32 %v659, 0.0
    %v724 = vmax.f32 %v660, 0.0
    %v725 = vmax.f32 %v661, 0.0
    %v726 = vmax.f32 %v662, 0.0
    %v727 = vmax.f32 %v663, 0.0
    %v728 = vmax.f32 %v664, 0.0
    %v729 = vmax.f32 %v665, 0.0
    %v730 = vmax.f32 %v666, 0.0
    %v731 = vmax.f32 %v667, 0.0
    %v732 = vmax.f32 %v668, 0.0
    %v733 = vmax.f32 %v669, 0.0
    %v734 = vmax.f32 %v670, 0.0
    %v735 = vmax.f32 %v671, 0.0
    %v736 = vmax.f32 %v672, 0.0
    %v737 = vmax.f32 %v673, 0.0
    %v738 = vmax.f32 %v674, 0.0
    %v739 = vmax.f32 %v675, 0.0
    %v740 = vmax.f32 %v676, 0.0
    %v741 = vmax.f32 %v677, 0.0
    %v742 = vmax.f32 %v678, 0.0
    %v743 = vmax.f32 %v679, 0.0
    %v744 = vmax.f32 %v680, 0.0
    %v745 = vmax.f32 %v681, 0.0
    %v746 = vmax.f32 %v682, 0.0
    %v747 = vmax.f32 %v683, 0.0
    %v748 = vmax.f32 %v684, 0.0
    %v749 = vmax.f32 %v685, 0.0
    %v750 = vmax.f32 %v686, 0.0
    %v751 = vmax.f32 %v687, 0.0
    %v752 = vmax.f32 %v688, 0.0
    %v753 = vmax.f32 %v689, 0.0
    %v754 = vmax.f32 %v690, 0.0
    %v755 = vmax.f32 %v691, 0.0
    %v756 = vadd.f32 %v692, 1e-06
    %v757 = vadd.f32 %v693, 1e-06
    %v758 = vadd.f32 %v694, 1e-06
    %v759 = vadd.f32 %v695, 1e-06
    %v760 = vadd.f32 %v696, 1e-06
    %v761 = vadd.f32 %v697, 1e-06
    %v762 = vadd.f32 %v698, 1e-06
    %v763 = vadd.f32 %v699, 1e-06
    %v764 = vadd.f32 %v700, 1e-06
    %v765 = vadd.f32 %v701, 1e-06
    %v766 = vadd.f32 %v702, 1e-06
    %v767 = vadd.f32 %v703, 1e-06
    %v768 = vadd.f32 %v704, 1e-06
    %v769 = vadd.f32 %v705, 1e-06
    %v770 = vadd.f32 %v706, 1e-06
    %v771 = vadd.f32 %v707, 1e-06
    %v772 = vadd.f32 %v708, 1e-06
    %v773 = vadd.f32 %v709, 1e-06
    %v774 = vadd.f32 %v710, 1e-06
    %v775 = vadd.f32 %v711, 1e-06
    %v776 = vadd.f32 %v712, 1e-06
    %v777 = vadd.f32 %v713, 1e-06
    %v778 = vadd.f32 %v714, 1e-06
    %v779 = vadd.f32 %v715, 1e-06
    %v780 = vadd.f32 %v716, 1e-06
    %v781 = vadd.f32 %v717, 1e-06
    %v782 = vadd.f32 %v718, 1e-06
    %v783 = vadd.f32 %v719, 1e-06
    %v784 = vadd.f32 %v720, 1e-06
    %v785 = vadd.f32 %v721, 1e-06
    %v786 = vadd.f32 %v722, 1e-06
    %v787 = vadd.f32 %v723, 1e-06
    %v788 = vadd.f32 %v724, 1e-06
    %v789 = vadd.f32 %v725, 1e-06
    %v790 = vadd.f32 %v726, 1e-06
    %v791 = vadd.f32 %v727, 1e-06
    %v792 = vadd.f32 %v728, 1e-06
    %v793 = vadd.f32 %v729, 1e-06
    %v794 = vadd.f32 %v730, 1e-06
    %v795 = vadd.f32 %v731, 1e-06
    %v796 = vadd.f32 %v732, 1e-06
    %v797 = vadd.f32 %v733, 1e-06
    %v798 = vadd.f32 %v734, 1e-06
    %v799 = vadd.f32 %v735, 1e-06
    %v800 = vadd.f32 %v736, 1e-06
    %v801 = vadd.f32 %v737, 1e-06
    %v802 = vadd.f32 %v738, 1e-06
    %v803 = vadd.f32 %v739, 1e-06
    %v804 = vadd.f32 %v740, 1e-06
    %v805 = vadd.f32 %v741, 1e-06
    %v806 = vadd.f32 %v742, 1e-06
    %v807 = vadd.f32 %v743, 1e-06
    %v808 = vadd.f32 %v744, 1e-06
    %v809 = vadd.f32 %v745, 1e-06
    %v810 = vadd.f32 %v746, 1e-06
    %v811 = vadd.f32 %v747, 1e-06
    %v812 = vadd.f32 %v748, 1e-06
    %v813 = vadd.f32 %v749, 1e-06
    %v814 = vadd.f32 %v750, 1e-06
    %v815 = vadd.f32 %v751, 1e-06
    %v816 = vadd.f32 %v752, 1e-06
    %v817 = vadd.f32 %v753, 1e-06
    %v818 = vadd.f32 %v754, 1e-06
    %v819 = vadd.f32 %v755, 1e-06
    %v820 = vrsqrt.pop %v756
    %v821 = vmul.f32 %v820, %v756
    %v822 = vmul.f32 %v821, %v820
    %v823 = vmul.f32 0.5, %v822
    %v824 = vsub.f32 1.5, %v823
    %v825 = vmul.f32 %v820, %v824
    %vm826 = vweird.f32 %v756
    %vm827 = vweird.f32 %v820
    %vm828 = vmor %vm826, %vm827
    %v829 = vsel %vm828, %v820, %v825
    %v830 = vrsqrt.pop %v757
    %v831 = vmul.f32 %v830, %v757
    %v832 = vmul.f32 %v831, %v830
    %v833 = vmul.f32 0.5, %v832
    %v834 = vsub.f32 1.5, %v833
    %v835 = vmul.f32 %v830, %v834
    %vm836 = vweird.f32 %v757
    %vm837 = vweird.f32 %v830
    %vm838 = vmor %vm836, %vm837
    %v839 = vsel %vm838, %v830, %v835
    %v840 = vrsqrt.pop %v758
    %v841 = vmul.f32 %v840, %v758
    %v842 = vmul.f32 %v841, %v840
    %v843 = vmul.f32 0.5, %v842
    %v844 = vsub.f32 1.5, %v843
    %v845 = vmul.f32 %v840, %v844
    %vm846 = vweird.f32 %v758
    %vm847 = vweird.f32 %v840
    %vm848 = vmor %vm846, %vm847
    %v849 = vsel %vm848, %v840, %v845
    %v850 = vrsqrt.pop %v759
    %v851 = vmul.f32 %v850, %v759
    %v852 = vmul.f32 %v851, %v850
    %v853 = vmul.f32 0.5, %v852
    %v854 = vsub.f32 1.5, %v853
    %v855 = vmul.f32 %v850, %v854
    %vm856 = vweird.f32 %v759
    %vm857 = vweird.f32 %v850
    %vm858 = vmor %vm856, %vm857
    %v859 = vsel %vm858, %v850, %v855
    %v860 = vrsqrt.pop %v760
    %v861 = vmul.f32 %v860, %v760
    %v862 = vmul.f32 %v861, %v860
    %v863 = vmul.f32 0.5, %v862
    %v864 = vsub.f32 1.5, %v863
    %v865 = vmul.f32 %v860, %v864
    %vm866 = vweird.f32 %v760
    %vm867 = vweird.f32 %v860
    %vm868 = vmor %vm866, %vm867
    %v869 = vsel %vm868, %v860, %v865
    %v870 = vrsqrt.pop %v761
    %v871 = vmul.f32 %v870, %v761
    %v872 = vmul.f32 %v871, %v870
    %v873 = vmul.f32 0.5, %v872
    %v874 = vsub.f32 1.5, %v873
    %v875 = vmul.f32 %v870, %v874
    %vm876 = vweird.f32 %v761
    %vm877 = vweird.f32 %v870
    %vm878 = vmor %vm876, %vm877
    %v879 = vsel %vm878, %v870, %v875
    %v880 = vrsqrt.pop %v762
    %v881 = vmul.f32 %v880, %v762
    %v882 = vmul.f32 %v881, %v880
    %v883 = vmul.f32 0.5, %v882
    %v884 = vsub.f32 1.5, %v883
    %v885 = vmul.f32 %v880, %v884
    %vm886 = vweird.f32 %v762
    %vm887 = vweird.f32 %v880
    %vm888 = vmor %vm886, %vm887
    %v889 = vsel %vm888, %v880, %v885
    %v890 = vrsqrt.pop %v763
    %v891 = vmul.f32 %v890, %v763
    %v892 = vmul.f32 %v891, %v890
    %v893 = vmul.f32 0.5, %v892
    %v894 = vsub.f32 1.5, %v893
    %v895 = vmul.f32 %v890, %v894
    %vm896 = vweird.f32 %v763
    %vm897 = vweird.f32 %v890
    %vm898 = vmor %vm896, %vm897
    %v899 = vsel %vm898, %v890, %v895
    %v900 = vrsqrt.pop %v764
    %v901 = vmul.f32 %v900, %v764
    %v902 = vmul.f32 %v901, %v900
    %v903 = vmul.f32 0.5, %v902
    %v904 = vsub.f32 1.5, %v903
    %v905 = vmul.f32 %v900, %v904
    %vm906 = vweird.f32 %v764
    %vm907 = vweird.f32 %v900
    %vm908 = vmor %vm906, %vm907
    %v909 = vsel %vm908, %v900, %v905
    %v910 = vrsqrt.pop %v765
    %v911 = vmul.f32 %v910, %v765
    %v912 = vmul.f32 %v911, %v910
    %v913 = vmul.f32 0.5, %v912
    %v914 = vsub.f32 1.5, %v913
    %v915 = vmul.f32 %v910, %v914
    %vm916 = vweird.f32 %v765
    %vm917 = vweird.f32 %v910
    %vm918 = vmor %vm916, %vm917
    %v919 = vsel %vm918, %v910, %v915
    %v920 = vrsqrt.pop %v766
    %v921 = vmul.f32 %v920, %v766
    %v922 = vmul.f32 %v921, %v920
    %v923 = vmul.f32 0.5, %v922
    %v924 = vsub.f32 1.5, %v923
    %v925 = vmul.f32 %v920, %v924
    %vm926 = vweird.f32 %v766
    %vm927 = vweird.f32 %v920
    %vm928 = vmor %vm926, %vm927
    %v929 = vsel %vm928, %v920, %v925
    %v930 = vrsqrt.pop %v767
    %v931 = vmul.f32 %v930, %v767
    %v932 = vmul.f32 %v931, %v930
    %v933 = vmul.f32 0.5, %v932
    %v934 = vsub.f32 1.5, %v933
    %v935 = vmul.f32 %v930, %v934
    %vm936 = vweird.f32 %v767
    %vm937 = vweird.f32 %v930
    %vm938 = vmor %vm936, %vm937
    %v939 = vsel %vm938, %v930, %v935
    %v940 = vrsqrt.pop %v768
    %v941 = vmul.f32 %v940, %v768
    %v942 = vmul.f32 %v941, %v940
    %v943 = vmul.f32 0.5, %v942
    %v944 = vsub.f32 1.5, %v943
    %v945 = vmul.f32 %v940, %v944
    %vm946 = vweird.f32 %v768
    %vm947 = vweird.f32 %v940
    %vm948 = vmor %vm946, %vm947
    %v949 = vsel %vm948, %v940, %v945
    %v950 = vrsqrt.pop %v769
    %v951 = vmul.f32 %v950, %v769
    %v952 = vmul.f32 %v951, %v950
    %v953 = vmul.f32 0.5, %v952
    %v954 = vsub.f32 1.5, %v953
    %v955 = vmul.f32 %v950, %v954
    %vm956 = vweird.f32 %v769
    %vm957 = vweird.f32 %v950
    %vm958 = vmor %vm956, %vm957
    %v959 = vsel %vm958, %v950, %v955
    %v960 = vrsqrt.pop %v770
    %v961 = vmul.f32 %v960, %v770
    %v962 = vmul.f32 %v961, %v960
    %v963 = vmul.f32 0.5, %v962
    %v964 = vsub.f32 1.5, %v963
    %v965 = vmul.f32 %v960, %v964
    %vm966 = vweird.f32 %v770
    %vm967 = vweird.f32 %v960
    %vm968 = vmor %vm966, %vm967
    %v969 = vsel %vm968, %v960, %v965
    %v970 = vrsqrt.pop %v771
    %v971 = vmul.f32 %v970, %v771
    %v972 = vmul.f32 %v971, %v970
    %v973 = vmul.f32 0.5, %v972
    %v974 = vsub.f32 1.5, %v973
    %v975 = vmul.f32 %v970, %v974
    %vm976 = vweird.f32 %v771
    %vm977 = vweird.f32 %v970
    %vm978 = vmor %vm976, %vm977
    %v979 = vsel %vm978, %v970, %v975
    %v980 = vrsqrt.pop %v772
    %v981 = vmul.f32 %v980, %v772
    %v982 = vmul.f32 %v981, %v980
    %v983 = vmul.f32 0.5, %v982
    %v984 = vsub.f32 1.5, %v983
    %v985 = vmul.f32 %v980, %v984
    %vm986 = vweird.f32 %v772
    %vm987 = vweird.f32 %v980
    %vm988 = vmor %vm986, %vm987
    %v989 = vsel %vm988, %v980, %v985
    %v990 = vrsqrt.pop %v773
    %v991 = vmul.f32 %v990, %v773
    %v992 = vmul.f32 %v991, %v990
    %v993 = vmul.f32 0.5, %v992
    %v994 = vsub.f32 1.5, %v993
    %v995 = vmul.f32 %v990, %v994
    %vm996 = vweird.f32 %v773
    %vm997 = vweird.f32 %v990
    %vm998 = vmor %vm996, %vm997
    %v999 = vsel %vm998, %v990, %v995
    %v1000 = vrsqrt.pop %v774
    %v1001 = vmul.f32 %v1000, %v774
    %v1002 = vmul.f32 %v1001, %v1000
    %v1003 = vmul.f32 0.5, %v1002
    %v1004 = vsub.f32 1.5, %v1003
    %v1005 = vmul.f32 %v1000, %v1004
    %vm1006 = vweird.f32 %v774
    %vm1007 = vweird.f32 %v1000
    %vm1008 = vmor %vm1006, %vm1007
    %v1009 = vsel %vm1008, %v1000, %v1005
    %v1010 = vrsqrt.pop %v775
    %v1011 = vmul.f32 %v1010, %v775
    %v1012 = vmul.f32 %v1011, %v1010
    %v1013 = vmul.f32 0.5, %v1012
    %v1014 = vsub.f32 1.5, %v1013
    %v1015 = vmul.f32 %v1010, %v1014
    %vm1016 = vweird.f32 %v775
    %vm1017 = vweird.f32 %v1010
    %vm1018 = vmor %vm1016, %vm1017
    %v1019 = vsel %vm1018, %v1010, %v1015
    %v1020 = vrsqrt.pop %v776
    %v1021 = vmul.f32 %v1020, %v776
    %v1022 = vmul.f32 %v1021, %v1020
    %v1023 = vmul.f32 0.5, %v1022
    %v1024 = vsub.f32 1.5, %v1023
    %v1025 = vmul.f32 %v1020, %v1024
    %vm1026 = vweird.f32 %v776
    %vm1027 = vweird.f32 %v1020
    %vm1028 = vmor %vm1026, %vm1027
    %v1029 = vsel %vm1028, %v1020, %v1025
    %v1030 = vrsqrt.pop %v777
    %v1031 = vmul.f32 %v1030, %v777
    %v1032 = vmul.f32 %v1031, %v1030
    %v1033 = vmul.f32 0.5, %v1032
    %v1034 = vsub.f32 1.5, %v1033
    %v1035 = vmul.f32 %v1030, %v1034
    %vm1036 = vweird.f32 %v777
    %vm1037 = vweird.f32 %v1030
    %vm1038 = vmor %vm1036, %vm1037
    %v1039 = vsel %vm1038, %v1030, %v1035
    %v1040 = vrsqrt.pop %v778
    %v1041 = vmul.f32 %v1040, %v778
    %v1042 = vmul.f32 %v1041, %v1040
    %v1043 = vmul.f32 0.5, %v1042
    %v1044 = vsub.f32 1.5, %v1043
    %v1045 = vmul.f32 %v1040, %v1044
    %vm1046 = vweird.f32 %v778
    %vm1047 = vweird.f32 %v1040
    %vm1048 = vmor %vm1046, %vm1047
    %v1049 = vsel %vm1048, %v1040, %v1045
    %v1050 = vrsqrt.pop %v779
    %v1051 = vmul.f32 %v1050, %v779
    %v1052 = vmul.f32 %v1051, %v1050
    %v1053 = vmul.f32 0.5, %v1052
    %v1054 = vsub.f32 1.5, %v1053
    %v1055 = vmul.f32 %v1050, %v1054
    %vm1056 = vweird.f32 %v779
    %vm1057 = vweird.f32 %v1050
    %vm1058 = vmor %vm1056, %vm1057
    %v1059 = vsel %vm1058, %v1050, %v1055
    %v1060 = vrsqrt.pop %v780
    %v1061 = vmul.f32 %v1060, %v780
    %v1062 = vmul.f32 %v1061, %v1060
    %v1063 = vmul.f32 0.5, %v1062
    %v1064 = vsub.f32 1.5, %v1063
    %v1065 = vmul.f32 %v1060, %v1064
    %vm1066 = vweird.f32 %v780
    %vm1067 = vweird.f32 %v1060
    %vm1068 = vmor %vm1066, %vm1067
    %v1069 = vsel %vm1068, %v1060, %v1065
    %v1070 = vrsqrt.pop %v781
    %v1071 = vmul.f32 %v1070, %v781
    %v1072 = vmul.f32 %v1071, %v1070
    %v1073 = vmul.f32 0.5, %v1072
    %v1074 = vsub.f32 1.5, %v1073
    %v1075 = vmul.f32 %v1070, %v1074
    %vm1076 = vweird.f32 %v781
    %vm1077 = vweird.f32 %v1070
    %vm1078 = vmor %vm1076, %vm1077
    %v1079 = vsel %vm1078, %v1070, %v1075
    %v1080 = vrsqrt.pop %v782
    %v1081 = vmul.f32 %v1080, %v782
    %v1082 = vmul.f32 %v1081, %v1080
    %v1083 = vmul.f32 0.5, %v1082
    %v1084 = vsub.f32 1.5, %v1083
    %v1085 = vmul.f32 %v1080, %v1084
    %vm1086 = vweird.f32 %v782
    %vm1087 = vweird.f32 %v1080
    %vm1088 = vmor %vm1086, %vm1087
    %v1089 = vsel %vm1088, %v1080, %v1085
    %v1090 = vrsqrt.pop %v783
    %v1091 = vmul.f32 %v1090, %v783
    %v1092 = vmul.f32 %v1091, %v1090
    %v1093 = vmul.f32 0.5, %v1092
    %v1094 = vsub.f32 1.5, %v1093
    %v1095 = vmul.f32 %v1090, %v1094
    %vm1096 = vweird.f32 %v783
    %vm1097 = vweird.f32 %v1090
    %vm1098 = vmor %vm1096, %vm1097
    %v1099 = vsel %vm1098, %v1090, %v1095
    %v1100 = vrsqrt.pop %v784
    %v1101 = vmul.f32 %v1100, %v784
    %v1102 = vmul.f32 %v1101, %v1100
    %v1103 = vmul.f32 0.5, %v1102
    %v1104 = vsub.f32 1.5, %v1103
    %v1105 = vmul.f32 %v1100, %v1104
    %vm1106 = vweird.f32 %v784
    %vm1107 = vweird.f32 %v1100
    %vm1108 = vmor %vm1106, %vm1107
    %v1109 = vsel %vm1108, %v1100, %v1105
    %v1110 = vrsqrt.pop %v785
    %v1111 = vmul.f32 %v1110, %v785
    %v1112 = vmul.f32 %v1111, %v1110
    %v1113 = vmul.f32 0.5, %v1112
    %v1114 = vsub.f32 1.5, %v1113
    %v1115 = vmul.f32 %v1110, %v1114
    %vm1116 = vweird.f32 %v785
    %vm1117 = vweird.f32 %v1110
    %vm1118 = vmor %vm1116, %vm1117
    %v1119 = vsel %vm1118, %v1110, %v1115
    %v1120 = vrsqrt.pop %v786
    %v1121 = vmul.f32 %v1120, %v786
    %v1122 = vmul.f32 %v1121, %v1120
    %v1123 = vmul.f32 0.5, %v1122
    %v1124 = vsub.f32 1.5, %v1123
    %v1125 = vmul.f32 %v1120, %v1124
    %vm1126 = vweird.f32 %v786
    %vm1127 = vweird.f32 %v1120
    %vm1128 = vmor %vm1126, %vm1127
    %v1129 = vsel %vm1128, %v1120, %v1125
    %v1130 = vrsqrt.pop %v787
    %v1131 = vmul.f32 %v1130, %v787
    %v1132 = vmul.f32 %v1131, %v1130
    %v1133 = vmul.f32 0.5, %v1132
    %v1134 = vsub.f32 1.5, %v1133
    %v1135 = vmul.f32 %v1130, %v1134
    %vm1136 = vweird.f32 %v787
    %vm1137 = vweird.f32 %v1130
    %vm1138 = vmor %vm1136, %vm1137
    %v1139 = vsel %vm1138, %v1130, %v1135
    %v1140 = vrsqrt.pop %v788
    %v1141 = vmul.f32 %v1140, %v788
    %v1142 = vmul.f32 %v1141, %v1140
    %v1143 = vmul.f32 0.5, %v1142
    %v1144 = vsub.f32 1.5, %v1143
    %v1145 = vmul.f32 %v1140, %v1144
    %vm1146 = vweird.f32 %v788
    %vm1147 = vweird.f32 %v1140
    %vm1148 = vmor %vm1146, %vm1147
    %v1149 = vsel %vm1148, %v1140, %v1145
    %v1150 = vrsqrt.pop %v789
    %v1151 = vmul.f32 %v1150, %v789
    %v1152 = vmul.f32 %v1151, %v1150
    %v1153 = vmul.f32 0.5, %v1152
    %v1154 = vsub.f32 1.5, %v1153
    %v1155 = vmul.f32 %v1150, %v1154
    %vm1156 = vweird.f32 %v789
    %vm1157 = vweird.f32 %v1150
    %vm1158 = vmor %vm1156, %vm1157
    %v1159 = vsel %vm1158, %v1150, %v1155
    %v1160 = vrsqrt.pop %v790
    %v1161 = vmul.f32 %v1160, %v790
    %v1162 = vmul.f32 %v1161, %v1160
    %v1163 = vmul.f32 0.5, %v1162
    %v1164 = vsub.f32 1.5, %v1163
    %v1165 = vmul.f32 %v1160, %v1164
    %vm1166 = vweird.f32 %v790
    %vm1167 = vweird.f32 %v1160
    %vm1168 = vmor %vm1166, %vm1167
    %v1169 = vsel %vm1168, %v1160, %v1165
    %v1170 = vrsqrt.pop %v791
    %v1171 = vmul.f32 %v1170, %v791
    %v1172 = vmul.f32 %v1171, %v1170
    %v1173 = vmul.f32 0.5, %v1172
    %v1174 = vsub.f32 1.5, %v1173
    %v1175 = vmul.f32 %v1170, %v1174
    %vm1176 = vweird.f32 %v791
    %vm1177 = vweird.f32 %v1170
    %vm1178 = vmor %vm1176, %vm1177
    %v1179 = vsel %vm1178, %v1170, %v1175
    %v1180 = vrsqrt.pop %v792
    %v1181 = vmul.f32 %v1180, %v792
    %v1182 = vmul.f32 %v1181, %v1180
    %v1183 = vmul.f32 0.5, %v1182
    %v1184 = vsub.f32 1.5, %v1183
    %v1185 = vmul.f32 %v1180, %v1184
    %vm1186 = vweird.f32 %v792
    %vm1187 = vweird.f32 %v1180
    %vm1188 = vmor %vm1186, %vm1187
    %v1189 = vsel %vm1188, %v1180, %v1185
    %v1190 = vrsqrt.pop %v793
    %v1191 = vmul.f32 %v1190, %v793
    %v1192 = vmul.f32 %v1191, %v1190
    %v1193 = vmul.f32 0.5, %v1192
    %v1194 = vsub.f32 1.5, %v1193
    %v1195 = vmul.f32 %v1190, %v1194
    %vm1196 = vweird.f32 %v793
    %vm1197 = vweird.f32 %v1190
    %vm1198 = vmor %vm1196, %vm1197
    %v1199 = vsel %vm1198, %v1190, %v1195
    %v1200 = vrsqrt.pop %v794
    %v1201 = vmul.f32 %v1200, %v794
    %v1202 = vmul.f32 %v1201, %v1200
    %v1203 = vmul.f32 0.5, %v1202
    %v1204 = vsub.f32 1.5, %v1203
    %v1205 = vmul.f32 %v1200, %v1204
    %vm1206 = vweird.f32 %v794
    %vm1207 = vweird.f32 %v1200
    %vm1208 = vmor %vm1206, %vm1207
    %v1209 = vsel %vm1208, %v1200, %v1205
    %v1210 = vrsqrt.pop %v795
    %v1211 = vmul.f32 %v1210, %v795
    %v1212 = vmul.f32 %v1211, %v1210
    %v1213 = vmul.f32 0.5, %v1212
    %v1214 = vsub.f32 1.5, %v1213
    %v1215 = vmul.f32 %v1210, %v1214
    %vm1216 = vweird.f32 %v795
    %vm1217 = vweird.f32 %v1210
    %vm1218 = vmor %vm1216, %vm1217
    %v1219 = vsel %vm1218, %v1210, %v1215
    %v1220 = vrsqrt.pop %v796
    %v1221 = vmul.f32 %v1220, %v796
    %v1222 = vmul.f32 %v1221, %v1220
    %v1223 = vmul.f32 0.5, %v1222
    %v1224 = vsub.f32 1.5, %v1223
    %v1225 = vmul.f32 %v1220, %v1224
    %vm1226 = vweird.f32 %v796
    %vm1227 = vweird.f32 %v1220
    %vm1228 = vmor %vm1226, %vm1227
    %v1229 = vsel %vm1228, %v1220, %v1225
    %v1230 = vrsqrt.pop %v797
    %v1231 = vmul.f32 %v1230, %v797
    %v1232 = vmul.f32 %v1231, %v1230
    %v1233 = vmul.f32 0.5, %v1232
    %v1234 = vsub.f32 1.5, %v1233
    %v1235 = vmul.f32 %v1230, %v1234
    %vm1236 = vweird.f32 %v797
    %vm1237 = vweird.f32 %v1230
    %vm1238 = vmor %vm1236, %vm1237
    %v1239 = vsel %vm1238, %v1230, %v1235
    %v1240 = vrsqrt.pop %v798
    %v1241 = vmul.f32 %v1240, %v798
    %v1242 = vmul.f32 %v1241, %v1240
    %v1243 = vmul.f32 0.5, %v1242
    %v1244 = vsub.f32 1.5, %v1243
    %v1245 = vmul.f32 %v1240, %v1244
    %vm1246 = vweird.f32 %v798
    %vm1247 = vweird.f32 %v1240
    %vm1248 = vmor %vm1246, %vm1247
    %v1249 = vsel %vm1248, %v1240, %v1245
    %v1250 = vrsqrt.pop %v799
    %v1251 = vmul.f32 %v1250, %v799
    %v1252 = vmul.f32 %v1251, %v1250
    %v1253 = vmul.f32 0.5, %v1252
    %v1254 = vsub.f32 1.5, %v1253
    %v1255 = vmul.f32 %v1250, %v1254
    %vm1256 = vweird.f32 %v799
    %vm1257 = vweird.f32 %v1250
    %vm1258 = vmor %vm1256, %vm1257
    %v1259 = vsel %vm1258, %v1250, %v1255
    %v1260 = vrsqrt.pop %v800
    %v1261 = vmul.f32 %v1260, %v800
    %v1262 = vmul.f32 %v1261, %v1260
    %v1263 = vmul.f32 0.5, %v1262
    %v1264 = vsub.f32 1.5, %v1263
    %v1265 = vmul.f32 %v1260, %v1264
    %vm1266 = vweird.f32 %v800
    %vm1267 = vweird.f32 %v1260
    %vm1268 = vmor %vm1266, %vm1267
    %v1269 = vsel %vm1268, %v1260, %v1265
    %v1270 = vrsqrt.pop %v801
    %v1271 = vmul.f32 %v1270, %v801
    %v1272 = vmul.f32 %v1271, %v1270
    %v1273 = vmul.f32 0.5, %v1272
    %v1274 = vsub.f32 1.5, %v1273
    %v1275 = vmul.f32 %v1270, %v1274
    %vm1276 = vweird.f32 %v801
    %vm1277 = vweird.f32 %v1270
    %vm1278 = vmor %vm1276, %vm1277
    %v1279 = vsel %vm1278, %v1270, %v1275
    %v1280 = vrsqrt.pop %v802
    %v1281 = vmul.f32 %v1280, %v802
    %v1282 = vmul.f32 %v1281, %v1280
    %v1283 = vmul.f32 0.5, %v1282
    %v1284 = vsub.f32 1.5, %v1283
    %v1285 = vmul.f32 %v1280, %v1284
    %vm1286 = vweird.f32 %v802
    %vm1287 = vweird.f32 %v1280
    %vm1288 = vmor %vm1286, %vm1287
    %v1289 = vsel %vm1288, %v1280, %v1285
    %v1290 = vrsqrt.pop %v803
    %v1291 = vmul.f32 %v1290, %v803
    %v1292 = vmul.f32 %v1291, %v1290
    %v1293 = vmul.f32 0.5, %v1292
    %v1294 = vsub.f32 1.5, %v1293
    %v1295 = vmul.f32 %v1290, %v1294
    %vm1296 = vweird.f32 %v803
    %vm1297 = vweird.f32 %v1290
    %vm1298 = vmor %vm1296, %vm1297
    %v1299 = vsel %vm1298, %v1290, %v1295
    %v1300 = vrsqrt.pop %v804
    %v1301 = vmul.f32 %v1300, %v804
    %v1302 = vmul.f32 %v1301, %v1300
    %v1303 = vmul.f32 0.5, %v1302
    %v1304 = vsub.f32 1.5, %v1303
    %v1305 = vmul.f32 %v1300, %v1304
    %vm1306 = vweird.f32 %v804
    %vm1307 = vweird.f32 %v1300
    %vm1308 = vmor %vm1306, %vm1307
    %v1309 = vsel %vm1308, %v1300, %v1305
    %v1310 = vrsqrt.pop %v805
    %v1311 = vmul.f32 %v1310, %v805
    %v1312 = vmul.f32 %v1311, %v1310
    %v1313 = vmul.f32 0.5, %v1312
    %v1314 = vsub.f32 1.5, %v1313
    %v1315 = vmul.f32 %v1310, %v1314
    %vm1316 = vweird.f32 %v805
    %vm1317 = vweird.f32 %v1310
    %vm1318 = vmor %vm1316, %vm1317
    %v1319 = vsel %vm1318, %v1310, %v1315
    %v1320 = vrsqrt.pop %v806
    %v1321 = vmul.f32 %v1320, %v806
    %v1322 = vmul.f32 %v1321, %v1320
    %v1323 = vmul.f32 0.5, %v1322
    %v1324 = vsub.f32 1.5, %v1323
    %v1325 = vmul.f32 %v1320, %v1324
    %vm1326 = vweird.f32 %v806
    %vm1327 = vweird.f32 %v1320
    %vm1328 = vmor %vm1326, %vm1327
    %v1329 = vsel %vm1328, %v1320, %v1325
    %v1330 = vrsqrt.pop %v807
    %v1331 = vmul.f32 %v1330, %v807
    %v1332 = vmul.f32 %v1331, %v1330
    %v1333 = vmul.f32 0.5, %v1332
    %v1334 = vsub.f32 1.5, %v1333
    %v1335 = vmul.f32 %v1330, %v1334
    %vm1336 = vweird.f32 %v807
    %vm1337 = vweird.f32 %v1330
    %vm1338 = vmor %vm1336, %vm1337
    %v1339 = vsel %vm1338, %v1330, %v1335
    %v1340 = vrsqrt.pop %v808
    %v1341 = vmul.f32 %v1340, %v808
    %v1342 = vmul.f32 %v1341, %v1340
    %v1343 = vmul.f32 0.5, %v1342
    %v1344 = vsub.f32 1.5, %v1343
    %v1345 = vmul.f32 %v1340, %v1344
    %vm1346 = vweird.f32 %v808
    %vm1347 = vweird.f32 %v1340
    %vm1348 = vmor %vm1346, %vm1347
    %v1349 = vsel %vm1348, %v1340, %v1345
    %v1350 = vrsqrt.pop %v809
    %v1351 = vmul.f32 %v1350, %v809
    %v1352 = vmul.f32 %v1351, %v1350
    %v1353 = vmul.f32 0.5, %v1352
    %v1354 = vsub.f32 1.5, %v1353
    %v1355 = vmul.f32 %v1350, %v1354
    %vm1356 = vweird.f32 %v809
    %vm1357 = vweird.f32 %v1350
    %vm1358 = vmor %vm1356, %vm1357
    %v1359 = vsel %vm1358, %v1350, %v1355
    %v1360 = vrsqrt.pop %v810
    %v1361 = vmul.f32 %v1360, %v810
    %v1362 = vmul.f32 %v1361, %v1360
    %v1363 = vmul.f32 0.5, %v1362
    %v1364 = vsub.f32 1.5, %v1363
    %v1365 = vmul.f32 %v1360, %v1364
    %vm1366 = vweird.f32 %v810
    %vm1367 = vweird.f32 %v1360
    %vm1368 = vmor %vm1366, %vm1367
    %v1369 = vsel %vm1368, %v1360, %v1365
    %v1370 = vrsqrt.pop %v811
    %v1371 = vmul.f32 %v1370, %v811
    %v1372 = vmul.f32 %v1371, %v1370
    %v1373 = vmul.f32 0.5, %v1372
    %v1374 = vsub.f32 1.5, %v1373
    %v1375 = vmul.f32 %v1370, %v1374
    %vm1376 = vweird.f32 %v811
    %vm1377 = vweird.f32 %v1370
    %vm1378 = vmor %vm1376, %vm1377
    %v1379 = vsel %vm1378, %v1370, %v1375
    %v1380 = vrsqrt.pop %v812
    %v1381 = vmul.f32 %v1380, %v812
    %v1382 = vmul.f32 %v1381, %v1380
    %v1383 = vmul.f32 0.5, %v1382
    %v1384 = vsub.f32 1.5, %v1383
    %v1385 = vmul.f32 %v1380, %v1384
    %vm1386 = vweird.f32 %v812
    %vm1387 = vweird.f32 %v1380
    %vm1388 = vmor %vm1386, %vm1387
    %v1389 = vsel %vm1388, %v1380, %v1385
    %v1390 = vrsqrt.pop %v813
    %v1391 = vmul.f32 %v1390, %v813
    %v1392 = vmul.f32 %v1391, %v1390
    %v1393 = vmul.f32 0.5, %v1392
    %v1394 = vsub.f32 1.5, %v1393
    %v1395 = vmul.f32 %v1390, %v1394
    %vm1396 = vweird.f32 %v813
    %vm1397 = vweird.f32 %v1390
    %vm1398 = vmor %vm1396, %vm1397
    %v1399 = vsel %vm1398, %v1390, %v1395
    %v1400 = vrsqrt.pop %v814
    %v1401 = vmul.f32 %v1400, %v814
    %v1402 = vmul.f32 %v1401, %v1400
    %v1403 = vmul.f32 0.5, %v1402
    %v1404 = vsub.f32 1.5, %v1403
    %v1405 = vmul.f32 %v1400, %v1404
    %vm1406 = vweird.f32 %v814
    %vm1407 = vweird.f32 %v1400
    %vm1408 = vmor %vm1406, %vm1407
    %v1409 = vsel %vm1408, %v1400, %v1405
    %v1410 = vrsqrt.pop %v815
    %v1411 = vmul.f32 %v1410, %v815
    %v1412 = vmul.f32 %v1411, %v1410
    %v1413 = vmul.f32 0.5, %v1412
    %v1414 = vsub.f32 1.5, %v1413
    %v1415 = vmul.f32 %v1410, %v1414
    %vm1416 = vweird.f32 %v815
    %vm1417 = vweird.f32 %v1410
    %vm1418 = vmor %vm1416, %vm1417
    %v1419 = vsel %vm1418, %v1410, %v1415
    %v1420 = vrsqrt.pop %v816
    %v1421 = vmul.f32 %v1420, %v816
    %v1422 = vmul.f32 %v1421, %v1420
    %v1423 = vmul.f32 0.5, %v1422
    %v1424 = vsub.f32 1.5, %v1423
    %v1425 = vmul.f32 %v1420, %v1424
    %vm1426 = vweird.f32 %v816
    %vm1427 = vweird.f32 %v1420
    %vm1428 = vmor %vm1426, %vm1427
    %v1429 = vsel %vm1428, %v1420, %v1425
    %v1430 = vrsqrt.pop %v817
    %v1431 = vmul.f32 %v1430, %v817
    %v1432 = vmul.f32 %v1431, %v1430
    %v1433 = vmul.f32 0.5, %v1432
    %v1434 = vsub.f32 1.5, %v1433
    %v1435 = vmul.f32 %v1430, %v1434
    %vm1436 = vweird.f32 %v817
    %vm1437 = vweird.f32 %v1430
    %vm1438 = vmor %vm1436, %vm1437
    %v1439 = vsel %vm1438, %v1430, %v1435
    %v1440 = vrsqrt.pop %v818
    %v1441 = vmul.f32 %v1440, %v818
    %v1442 = vmul.f32 %v1441, %v1440
    %v1443 = vmul.f32 0.5, %v1442
    %v1444 = vsub.f32 1.5, %v1443
    %v1445 = vmul.f32 %v1440, %v1444
    %vm1446 = vweird.f32 %v818
    %vm1447 = vweird.f32 %v1440
    %vm1448 = vmor %vm1446, %vm1447
    %v1449 = vsel %vm1448, %v1440, %v1445
    %v1450 = vrsqrt.pop %v819
    %v1451 = vmul.f32 %v1450, %v819
    %v1452 = vmul.f32 %v1451, %v1450
    %v1453 = vmul.f32 0.5, %v1452
    %v1454 = vsub.f32 1.5, %v1453
    %v1455 = vmul.f32 %v1450, %v1454
    %vm1456 = vweird.f32 %v819
    %vm1457 = vweird.f32 %v1450
    %vm1458 = vmor %vm1456, %vm1457
    %v1459 = vsel %vm1458, %v1450, %v1455
    %v1460 = vld [vmem:[#allocation5] sm:$0x1]
    %v1461 = vld [vmem:[%s2] sm:$0x1]
    %v1462 = vsub.f32 %v45, %v244
    %v1463 = vsub.f32 %v46, %v245
    %v1464 = vsub.f32 %v47, %v246
    %v1465 = vsub.f32 %v48, %v247
    %v1466 = vsub.f32 %v49, %v248
    %v1467 = vsub.f32 %v50, %v249
    %v1468 = vsub.f32 %v51, %v250
    %v1469 = vsub.f32 %v52, %v251
    %v1470 = vsub.f32 %v53, %v252
    %v1471 = vsub.f32 %v54, %v253
    %v1472 = vsub.f32 %v55, %v254
    %v1473 = vsub.f32 %v56, %v255
    %v1474 = vsub.f32 %v57, %v256
    %v1475 = vsub.f32 %v58, %v257
    %v1476 = vsub.f32 %v59, %v258
    %v1477 = vsub.f32 %v60, %v259
    %v1478 = vsub.f32 %v61, %v260
    %v1479 = vsub.f32 %v62, %v261
    %v1480 = vsub.f32 %v63, %v262
    %v1481 = vsub.f32 %v64, %v263
    %v1482 = vsub.f32 %v65, %v264
    %v1483 = vsub.f32 %v66, %v265
    %v1484 = vsub.f32 %v67, %v266
    %v1485 = vsub.f32 %v68, %v267
    %v1486 = vsub.f32 %v69, %v268
    %v1487 = vsub.f32 %v70, %v269
    %v1488 = vsub.f32 %v71, %v270
    %v1489 = vsub.f32 %v72, %v271
    %v1490 = vsub.f32 %v73, %v272
    %v1491 = vsub.f32 %v74, %v273
    %v1492 = vsub.f32 %v75, %v274
    %v1493 = vsub.f32 %v76, %v275
    %v1494 = vsub.f32 %v77, %v276
    %v1495 = vsub.f32 %v78, %v277
    %v1496 = vsub.f32 %v79, %v278
    %v1497 = vsub.f32 %v80, %v279
    %v1498 = vsub.f32 %v81, %v280
    %v1499 = vsub.f32 %v82, %v281
    %v1500 = vsub.f32 %v83, %v282
    %v1501 = vsub.f32 %v84, %v283
    %v1502 = vsub.f32 %v85, %v284
    %v1503 = vsub.f32 %v86, %v285
    %v1504 = vsub.f32 %v87, %v286
    %v1505 = vsub.f32 %v88, %v287
    %v1506 = vsub.f32 %v89, %v288
    %v1507 = vsub.f32 %v90, %v289
    %v1508 = vsub.f32 %v91, %v290
    %v1509 = vsub.f32 %v92, %v291
    %v1510 = vsub.f32 %v93, %v292
    %v1511 = vsub.f32 %v94, %v293
    %v1512 = vsub.f32 %v95, %v294
    %v1513 = vsub.f32 %v96, %v295
    %v1514 = vsub.f32 %v97, %v296
    %v1515 = vsub.f32 %v98, %v297
    %v1516 = vsub.f32 %v99, %v298
    %v1517 = vsub.f32 %v100, %v299
    %v1518 = vsub.f32 %v101, %v300
    %v1519 = vsub.f32 %v102, %v301
    %v1520 = vsub.f32 %v103, %v302
    %v1521 = vsub.f32 %v104, %v303
    %v1522 = vsub.f32 %v105, %v304
    %v1523 = vsub.f32 %v106, %v305
    %v1524 = vsub.f32 %v107, %v306
    %v1525 = vsub.f32 %v108, %v307
    %v1526 = vmul.f32 %v1462, %v829
    %v1527 = vmul.f32 %v1463, %v839
    %v1528 = vmul.f32 %v1464, %v849
    %v1529 = vmul.f32 %v1465, %v859
    %v1530 = vmul.f32 %v1466, %v869
    %v1531 = vmul.f32 %v1467, %v879
    %v1532 = vmul.f32 %v1468, %v889
    %v1533 = vmul.f32 %v1469, %v899
    %v1534 = vmul.f32 %v1470, %v909
    %v1535 = vmul.f32 %v1471, %v919
    %v1536 = vmul.f32 %v1472, %v929
    %v1537 = vmul.f32 %v1473, %v939
    %v1538 = vmul.f32 %v1474, %v949
    %v1539 = vmul.f32 %v1475, %v959
    %v1540 = vmul.f32 %v1476, %v969
    %v1541 = vmul.f32 %v1477, %v979
    %v1542 = vmul.f32 %v1478, %v989
    %v1543 = vmul.f32 %v1479, %v999
    %v1544 = vmul.f32 %v1480, %v1009
    %v1545 = vmul.f32 %v1481, %v1019
    %v1546 = vmul.f32 %v1482, %v1029
    %v1547 = vmul.f32 %v1483, %v1039
    %v1548 = vmul.f32 %v1484, %v1049
    %v1549 = vmul.f32 %v1485, %v1059
    %v1550 = vmul.f32 %v1486, %v1069
    %v1551 = vmul.f32 %v1487, %v1079
    %v1552 = vmul.f32 %v1488, %v1089
    %v1553 = vmul.f32 %v1489, %v1099
    %v1554 = vmul.f32 %v1490, %v1109
    %v1555 = vmul.f32 %v1491, %v1119
    %v1556 = vmul.f32 %v1492, %v1129
    %v1557 = vmul.f32 %v1493, %v1139
    %v1558 = vmul.f32 %v1494, %v1149
    %v1559 = vmul.f32 %v1495, %v1159
    %v1560 = vmul.f32 %v1496, %v1169
    %v1561 = vmul.f32 %v1497, %v1179
    %v1562 = vmul.f32 %v1498, %v1189
    %v1563 = vmul.f32 %v1499, %v1199
    %v1564 = vmul.f32 %v1500, %v1209
    %v1565 = vmul.f32 %v1501, %v1219
    %v1566 = vmul.f32 %v1502, %v1229
    %v1567 = vmul.f32 %v1503, %v1239
    %v1568 = vmul.f32 %v1504, %v1249
    %v1569 = vmul.f32 %v1505, %v1259
    %v1570 = vmul.f32 %v1506, %v1269
    %v1571 = vmul.f32 %v1507, %v1279
    %v1572 = vmul.f32 %v1508, %v1289
    %v1573 = vmul.f32 %v1509, %v1299
    %v1574 = vmul.f32 %v1510, %v1309
    %v1575 = vmul.f32 %v1511, %v1319
    %v1576 = vmul.f32 %v1512, %v1329
    %v1577 = vmul.f32 %v1513, %v1339
    %v1578 = vmul.f32 %v1514, %v1349
    %v1579 = vmul.f32 %v1515, %v1359
    %v1580 = vmul.f32 %v1516, %v1369
    %v1581 = vmul.f32 %v1517, %v1379
    %v1582 = vmul.f32 %v1518, %v1389
    %v1583 = vmul.f32 %v1519, %v1399
    %v1584 = vmul.f32 %v1520, %v1409
    %v1585 = vmul.f32 %v1521, %v1419
    %v1586 = vmul.f32 %v1522, %v1429
    %v1587 = vmul.f32 %v1523, %v1439
    %v1588 = vmul.f32 %v1524, %v1449
    %v1589 = vmul.f32 %v1525, %v1459
    %v1591 = vperm.slane %v1460, 0
    %v1593 = vmul.f32 %v1526, %v1591
    %v1594 = vmul.f32 %v1527, %v1591
    %v1595 = vmul.f32 %v1528, %v1591
    %v1596 = vmul.f32 %v1529, %v1591
    %v1597 = vmul.f32 %v1530, %v1591
    %v1598 = vmul.f32 %v1531, %v1591
    %v1599 = vmul.f32 %v1532, %v1591
    %v1600 = vmul.f32 %v1533, %v1591
    %v1601 = vmul.f32 %v1534, %v1591
    %v1602 = vmul.f32 %v1535, %v1591
    %v1603 = vmul.f32 %v1536, %v1591
    %v1604 = vmul.f32 %v1537, %v1591
    %v1605 = vmul.f32 %v1538, %v1591
    %v1606 = vmul.f32 %v1539, %v1591
    %v1607 = vmul.f32 %v1540, %v1591
    %v1608 = vmul.f32 %v1541, %v1591
    %v1609 = vmul.f32 %v1542, %v1591
    %v1610 = vmul.f32 %v1543, %v1591
    %v1611 = vmul.f32 %v1544, %v1591
    %v1612 = vmul.f32 %v1545, %v1591
    %v1613 = vmul.f32 %v1546, %v1591
    %v1614 = vmul.f32 %v1547, %v1591
    %v1615 = vmul.f32 %v1548, %v1591
    %v1616 = vmul.f32 %v1549, %v1591
    %v1617 = vmul.f32 %v1550, %v1591
    %v1618 = vmul.f32 %v1551, %v1591
    %v1619 = vmul.f32 %v1552, %v1591
    %v1620 = vmul.f32 %v1553, %v1591
    %v1621 = vmul.f32 %v1554, %v1591
    %v1622 = vmul.f32 %v1555, %v1591
    %v1623 = vmul.f32 %v1556, %v1591
    %v1624 = vmul.f32 %v1557, %v1591
    %v1625 = vmul.f32 %v1558, %v1591
    %v1626 = vmul.f32 %v1559, %v1591
    %v1627 = vmul.f32 %v1560, %v1591
    %v1628 = vmul.f32 %v1561, %v1591
    %v1629 = vmul.f32 %v1562, %v1591
    %v1630 = vmul.f32 %v1563, %v1591
    %v1631 = vmul.f32 %v1564, %v1591
    %v1632 = vmul.f32 %v1565, %v1591
    %v1633 = vmul.f32 %v1566, %v1591
    %v1634 = vmul.f32 %v1567, %v1591
    %v1635 = vmul.f32 %v1568, %v1591
    %v1636 = vmul.f32 %v1569, %v1591
    %v1637 = vmul.f32 %v1570, %v1591
    %v1638 = vmul.f32 %v1571, %v1591
    %v1639 = vmul.f32 %v1572, %v1591
    %v1640 = vmul.f32 %v1573, %v1591
    %v1641 = vmul.f32 %v1574, %v1591
    %v1642 = vmul.f32 %v1575, %v1591
    %v1643 = vmul.f32 %v1576, %v1591
    %v1644 = vmul.f32 %v1577, %v1591
    %v1645 = vmul.f32 %v1578, %v1591
    %v1646 = vmul.f32 %v1579, %v1591
    %v1647 = vmul.f32 %v1580, %v1591
    %v1648 = vmul.f32 %v1581, %v1591
    %v1649 = vmul.f32 %v1582, %v1591
    %v1650 = vmul.f32 %v1583, %v1591
    %v1651 = vmul.f32 %v1584, %v1591
    %v1652 = vmul.f32 %v1585, %v1591
    %v1653 = vmul.f32 %v1586, %v1591
    %v1654 = vmul.f32 %v1587, %v1591
    %v1655 = vmul.f32 %v1588, %v1591
    %v1656 = vmul.f32 %v1589, %v1591
    %v1658 = vperm.slane %v1461, 0
    %v1660 = vadd.f32 %v1593, %v1658
    %v1661 = vadd.f32 %v1594, %v1658
    %v1662 = vadd.f32 %v1595, %v1658
    %v1663 = vadd.f32 %v1596, %v1658
    %v1664 = vadd.f32 %v1597, %v1658
    %v1665 = vadd.f32 %v1598, %v1658
    %v1666 = vadd.f32 %v1599, %v1658
    %v1667 = vadd.f32 %v1600, %v1658
    %v1668 = vadd.f32 %v1601, %v1658
    %v1669 = vadd.f32 %v1602, %v1658
    %v1670 = vadd.f32 %v1603, %v1658
    %v1671 = vadd.f32 %v1604, %v1658
    %v1672 = vadd.f32 %v1605, %v1658
    %v1673 = vadd.f32 %v1606, %v1658
    %v1674 = vadd.f32 %v1607, %v1658
    %v1675 = vadd.f32 %v1608, %v1658
    %v1676 = vadd.f32 %v1609, %v1658
    %v1677 = vadd.f32 %v1610, %v1658
    %v1678 = vadd.f32 %v1611, %v1658
    %v1679 = vadd.f32 %v1612, %v1658
    %v1680 = vadd.f32 %v1613, %v1658
    %v1681 = vadd.f32 %v1614, %v1658
    %v1682 = vadd.f32 %v1615, %v1658
    %v1683 = vadd.f32 %v1616, %v1658
    %v1684 = vadd.f32 %v1617, %v1658
    %v1685 = vadd.f32 %v1618, %v1658
    %v1686 = vadd.f32 %v1619, %v1658
    %v1687 = vadd.f32 %v1620, %v1658
    %v1688 = vadd.f32 %v1621, %v1658
    %v1689 = vadd.f32 %v1622, %v1658
    %v1690 = vadd.f32 %v1623, %v1658
    %v1691 = vadd.f32 %v1624, %v1658
    %v1692 = vadd.f32 %v1625, %v1658
    %v1693 = vadd.f32 %v1626, %v1658
    %v1694 = vadd.f32 %v1627, %v1658
    %v1695 = vadd.f32 %v1628, %v1658
    %v1696 = vadd.f32 %v1629, %v1658
    %v1697 = vadd.f32 %v1630, %v1658
    %v1698 = vadd.f32 %v1631, %v1658
    %v1699 = vadd.f32 %v1632, %v1658
    %v1700 = vadd.f32 %v1633, %v1658
    %v1701 = vadd.f32 %v1634, %v1658
    %v1702 = vadd.f32 %v1635, %v1658
    %v1703 = vadd.f32 %v1636, %v1658
    %v1704 = vadd.f32 %v1637, %v1658
    %v1705 = vadd.f32 %v1638, %v1658
    %v1706 = vadd.f32 %v1639, %v1658
    %v1707 = vadd.f32 %v1640, %v1658
    %v1708 = vadd.f32 %v1641, %v1658
    %v1709 = vadd.f32 %v1642, %v1658
    %v1710 = vadd.f32 %v1643, %v1658
    %v1711 = vadd.f32 %v1644, %v1658
    %v1712 = vadd.f32 %v1645, %v1658
    %v1713 = vadd.f32 %v1646, %v1658
    %v1714 = vadd.f32 %v1647, %v1658
    %v1715 = vadd.f32 %v1648, %v1658
    %v1716 = vadd.f32 %v1649, %v1658
    %v1717 = vadd.f32 %v1650, %v1658
    %v1718 = vadd.f32 %v1651, %v1658
    %v1719 = vadd.f32 %v1652, %v1658
    %v1720 = vadd.f32 %v1653, %v1658
    %v1721 = vadd.f32 %v1654, %v1658
    %v1722 = vadd.f32 %v1655, %v1658
    %v1723 = vadd.f32 %v1656, %v1658
    %1724 = vst [vmem:[#allocation7] sm:$0xff] %v1660
    %1725 = vst [vmem:[#allocation7 + $0x8] sm:$0xff] %v1661
    %1726 = vst [vmem:[#allocation7 + $0x10] sm:$0xff] %v1662
    %1727 = vst [vmem:[#allocation7 + $0x18] sm:$0xff] %v1663
    %1728 = vst [vmem:[#allocation7 + $0x20] sm:$0xff] %v1664
    %1729 = vst [vmem:[#allocation7 + $0x28] sm:$0xff] %v1665
    %1730 = vst [vmem:[#allocation7 + $0x30] sm:$0xff] %v1666
    %1731 = vst [vmem:[#allocation7 + $0x38] sm:$0xff] %v1667
    %1732 = vst [vmem:[#allocation7 + $0x40] sm:$0xff] %v1668
    %1733 = vst [vmem:[#allocation7 + $0x48] sm:$0xff] %v1669
    %1734 = vst [vmem:[#allocation7 + $0x50] sm:$0xff] %v1670
    %1735 = vst [vmem:[#allocation7 + $0x58] sm:$0xff] %v1671
    %1736 = vst [vmem:[#allocation7 + $0x60] sm:$0xff] %v1672
    %1737 = vst [vmem:[#allocation7 + $0x68] sm:$0xff] %v1673
    %1738 = vst [vmem:[#allocation7 + $0x70] sm:$0xff] %v1674
    %1739 = vst [vmem:[#allocation7 + $0x78] sm:$0xff] %v1675
    %1740 = vst [vmem:[#allocation7 + $0x80] sm:$0xff] %v1676
    %1741 = vst [vmem:[#allocation7 + $0x88] sm:$0xff] %v1677
    %1742 = vst [vmem:[#allocation7 + $0x90] sm:$0xff] %v1678
    %1743 = vst [vmem:[#allocation7 + $0x98] sm:$0xff] %v1679
    %1744 = vst [vmem:[#allocation7 + $0xa0] sm:$0xff] %v1680
    %1745 = vst [vmem:[#allocation7 + $0xa8] sm:$0xff] %v1681
    %1746 = vst [vmem:[#allocation7 + $0xb0] sm:$0xff] %v1682
    %1747 = vst [vmem:[#allocation7 + $0xb8] sm:$0xff] %v1683
    %1748 = vst [vmem:[#allocation7 + $0xc0] sm:$0xff] %v1684
    %1749 = vst [vmem:[#allocation7 + $0xc8] sm:$0xff] %v1685
    %1750 = vst [vmem:[#allocation7 + $0xd0] sm:$0xff] %v1686
    %1751 = vst [vmem:[#allocation7 + $0xd8] sm:$0xff] %v1687
    %1752 = vst [vmem:[#allocation7 + $0xe0] sm:$0xff] %v1688
    %1753 = vst [vmem:[#allocation7 + $0xe8] sm:$0xff] %v1689
    %1754 = vst [vmem:[#allocation7 + $0xf0] sm:$0xff] %v1690
    %1755 = vst [vmem:[#allocation7 + $0xf8] sm:$0xff] %v1691
    %1756 = vst [vmem:[#allocation7 + $0x100] sm:$0xff] %v1692
    %1757 = vst [vmem:[#allocation7 + $0x108] sm:$0xff] %v1693
    %1758 = vst [vmem:[#allocation7 + $0x110] sm:$0xff] %v1694
    %1759 = vst [vmem:[#allocation7 + $0x118] sm:$0xff] %v1695
    %1760 = vst [vmem:[#allocation7 + $0x120] sm:$0xff] %v1696
    %1761 = vst [vmem:[#allocation7 + $0x128] sm:$0xff] %v1697
    %1762 = vst [vmem:[#allocation7 + $0x130] sm:$0xff] %v1698
    %1763 = vst [vmem:[#allocation7 + $0x138] sm:$0xff] %v1699
    %1764 = vst [vmem:[#allocation7 + $0x140] sm:$0xff] %v1700
    %1765 = vst [vmem:[#allocation7 + $0x148] sm:$0xff] %v1701
    %1766 = vst [vmem:[#allocation7 + $0x150] sm:$0xff] %v1702
    %1767 = vst [vmem:[#allocation7 + $0x158] sm:$0xff] %v1703
    %1768 = vst [vmem:[#allocation7 + $0x160] sm:$0xff] %v1704
    %1769 = vst [vmem:[#allocation7 + $0x168] sm:$0xff] %v1705
    %1770 = vst [vmem:[#allocation7 + $0x170] sm:$0xff] %v1706
    %1771 = vst [vmem:[#allocation7 + $0x178] sm:$0xff] %v1707
    %1772 = vst [vmem:[#allocation7 + $0x180] sm:$0xff] %v1708
    %1773 = vst [vmem:[#allocation7 + $0x188] sm:$0xff] %v1709
    %1774 = vst [vmem:[#allocation7 + $0x190] sm:$0xff] %v1710
    %1775 = vst [vmem:[#allocation7 + $0x198] sm:$0xff] %v1711
    %1776 = vst [vmem:[#allocation7 + $0x1a0] sm:$0xff] %v1712
    %1777 = vst [vmem:[#allocation7 + $0x1a8] sm:$0xff] %v1713
    %1778 = vst [vmem:[#allocation7 + $0x1b0] sm:$0xff] %v1714
    %1779 = vst [vmem:[#allocation7 + $0x1b8] sm:$0xff] %v1715
    %1780 = vst [vmem:[#allocation7 + $0x1c0] sm:$0xff] %v1716
    %1781 = vst [vmem:[#allocation7 + $0x1c8] sm:$0xff] %v1717
    %1782 = vst [vmem:[#allocation7 + $0x1d0] sm:$0xff] %v1718
    %1783 = vst [vmem:[#allocation7 + $0x1d8] sm:$0xff] %v1719
    %1784 = vst [vmem:[#allocation7 + $0x1e0] sm:$0xff] %v1720
    %1785 = vst [vmem:[#allocation7 + $0x1e8] sm:$0xff] %v1721
    %1786 = vst [vmem:[#allocation7 + $0x1f0] sm:$0xff] %v1722
    %1787 = vst [vmem:[#allocation7 + $0x1f8] sm:$0xff] %v1723
    // Predicated region
    $region22: #{tpu_custom_call.1} parent=1 // pred_check
      _
    $region23: #{tpu_custom_call.1} parent=1 // pred_check_branch
      %1789 = sbr.rel (0) target = $region25
    $region24: #{tpu_custom_call.1} parent=1 // pred_region
      %1791 = vsyncadd [#allocation4], 0
      %s1792 = sshll.u32 [#allocation7], 4
      %s1793 = int_to_ptr.vmem [resolvable:$true] %s1792
      %s1794 = sshll.u32 %s3, 4
      %s1795 = int_to_ptr.hbm [resolvable:$true] %s1794
      %1800 = dma.vmem_to_hbm [thread:$0]  %s1793, 8192, %s1795, [#allocation4], 128, 128, 8
    $region25: #{tpu_custom_call.1} parent=1 // pred_fallthru
      _
    // Predicated region
    $region26: #{tpu_custom_call.1} parent=1 // pred_check
      _
    $region27: #{tpu_custom_call.1} parent=1 // pred_check_branch
      %1802 = sbr.rel (0) target = $region29
    $region28: #{tpu_custom_call.1} parent=1 // pred_region
      %1804 = dma.done [#allocation4], 8192
    $region29: #{tpu_custom_call.1} parent=1 // pred_fallthru
      _
    %1805 = vsyncpa [#allocation3], 1
    %1806 = vsyncpa [#allocation6], 1
    %1807 = vsyncpa [#allocation4], 1

</llo_original>
